<compile_context>
chip_gen: v7x
topology: tpu7x:2x2x1
jax: 0.10.0
libtpu: 0.0.40
codegen_flags: <defaults>
</compile_context>

<pallas_src>
import functools

import jax
import jax.numpy as jnp
from jax.experimental import pallas as pl
from jax.experimental.pallas import tpu as pltpu

STATE_DIM = 6          # HIVPatient observation_space.shape[0]
NB_NEURONS = 256
NB_ACTIONS = 4         # HIVPatient action_space.n
NUM_HIDDEN_LAYERS = 4  # number of (Linear(256,256) + ReLU) blocks after the first layer


# ---------------------------------------------------------------------------
# helpers
# ---------------------------------------------------------------------------
def _cdiv(a, b):
    return (a + b - 1) // b


def _round_up(a, b):
    return _cdiv(a, b) * b


def _pad_axis(a, axis, target):
    pad = target - a.shape[axis]
    if pad <= 0:
        return a
    widths = [(0, 0)] * a.ndim
    widths[axis] = (0, pad)
    return jnp.pad(a, widths)


def _device_kind():
    try:
        return jax.devices()[0].device_kind.lower()
    except Exception:
        return ""


def _has_two_tensorcores(kind):
    # v7x exposes 2 TensorCores per chip; v5e/v6e have 1.
    return "v7" in kind


def _elementwise_dtype(kind):
    # bf16 VALU exists on v6e/v7x (elementwise chain is the binding slot there);
    # v5e (and unknown) have no bf16 VPU path -> keep f32 elementwise.
    if "v6" in kind or "v7" in kind:
        return jnp.bfloat16
    return jnp.float32


def _choose_tiling(batch, kind):
    """Pick (batch_tile, n_tiles).  Big tiles to amortize per-step overhead; on v7x
    force an even number (>=2) of parallel steps so both TensorCores get work."""
    b8 = _round_up(max(batch, 1), 8)
    two_cores = _has_two_tensorcores(kind)
    max_tile = 2048 if two_cores else 4096   # lower per-tile VMEM cap on v7x (64 MiB)
    if two_cores and b8 > 128:
        n_tiles = max(2, 2 * _cdiv(b8, 2 * max_tile))   # even, >= 2
    else:
        n_tiles = _cdiv(b8, max_tile)                    # >= 1
    batch_tile = _round_up(_cdiv(b8, n_tiles), 8)
    return batch_tile, n_tiles


# ---------------------------------------------------------------------------
# kernel
# ---------------------------------------------------------------------------
def mlp_kernel(x_ref, *refs, ew_dtype):
    """Full MLP forward on one batch tile, entirely in VMEM.

    refs = (w0, b0, w1, b1, ..., wL, bL, out_ref)
    Matmuls: bf16 x bf16 operands, f32 MXU accumulation.
    Bias-add / ReLU: `ew_dtype` (bf16 on v6e/v7x, f32 on v5e).
    Hidden layers use ReLU; the final layer is linear (Q-values).
    """
    out_ref = refs[-1]
    param_refs = refs[:-1]
    n_layers = len(param_refs) // 2

    h = x_ref[...]                                   # bf16 (tile, d_pad)
    for li in range(n_layers):
        w = param_refs[2 * li][...]                  # bf16 (in, out)
        b = param_refs[2 * li + 1][...]              # ew_dtype (1, out) -> broadcasts
        acc = jnp.dot(h, w, preferred_element_type=jnp.float32)
        acc = acc.astype(ew_dtype) + b
        if li < n_layers - 1:                        # ReLU on all but the last layer
            acc = jnp.maximum(acc, 0.0)
            h = acc.astype(jnp.bfloat16)
        else:
            h = acc
    out_ref[...] = h.astype(out_ref.dtype)


# ---------------------------------------------------------------------------
# wrapper
# ---------------------------------------------------------------------------
def prepare_params(params, ew_dtype):
    """One-time param prep: pad first-layer K to a multiple of 8 (sublane), pad the
    final layer's output to a multiple of 128 (lane-dense stores), cast W to bf16
    and biases to the elementwise dtype."""
    prepared = []
    n = len(params)
    for li, (w, b) in enumerate(params):
        w = jnp.asarray(w, jnp.float32)
        b = jnp.asarray(b, jnp.float32).reshape(1, -1)
        if li == 0:
            w = _pad_axis(w, 0, _round_up(max(w.shape[0], 8), 8))
        if li == n - 1:
            n_pad = _round_up(max(w.shape[1], 128), 128)
            w = _pad_axis(w, 1, n_pad)
            b = _pad_axis(b, 1, n_pad)
        prepared.append((w.astype(jnp.bfloat16), b.astype(ew_dtype)))
    return prepared


def mlp_forward(x, prepared_params, nb_actions, *, ew_dtype=None, batch_tile=None):
    """Run the MLP with a Pallas kernel, tiling only the batch dimension."""
    kind = _device_kind()
    if ew_dtype is None:
        ew_dtype = _elementwise_dtype(kind)

    B, _ = x.shape
    d_pad = prepared_params[0][0].shape[0]        # padded input feature dim (e.g. 8)
    n_out_pad = prepared_params[-1][0].shape[1]   # padded output dim (e.g. 128)

    if batch_tile is None:
        batch_tile, n_tiles = _choose_tiling(B, kind)
    else:
        batch_tile = _round_up(batch_tile, 8)
        n_tiles = _cdiv(_round_up(B, 8), batch_tile)
    b_pad = n_tiles * batch_tile

    # x consumed only as bf16 by the MXU -> cast in the wrapper (halves input DMA).
    x_p = _pad_axis(_pad_axis(x.astype(jnp.bfloat16), 1, d_pad), 0, b_pad)

    # x tile follows the grid; every weight/bias is the full array at block (0, 0).
    in_specs = [pl.BlockSpec((batch_tile, d_pad), lambda i: (i, 0))]
    flat_params = []
    for (w, b) in prepared_params:
        in_specs.append(pl.BlockSpec(w.shape, lambda i: (0, 0)))
        in_specs.append(pl.BlockSpec(b.shape, lambda i: (0, 0)))
        flat_params.extend([w, b])

    out_spec = pl.BlockSpec((batch_tile, n_out_pad), lambda i: (i, 0))

    # Advisory cost estimate so XLA schedules around the call.
    flops = 2 * b_pad * sum(int(w.shape[0]) * int(w.shape[1]) for w, _ in prepared_params)
    bytes_accessed = int(
        x_p.size * 2
        + sum(a.size * jnp.dtype(a.dtype).itemsize for a in flat_params)
        + b_pad * n_out_pad * 2
    )
    cost = pl.CostEstimate(flops=int(flops), transcendentals=0,
                           bytes_accessed=bytes_accessed)

    # Per-tile footprint is small (~3 KB/row + ~1.2 MB weights); cap lower on v7x
    # (64 MiB physical VMEM per TC) than on v5e/v6e (128 MiB).
    vmem_limit = (48 << 20) if _has_two_tensorcores(kind) else (96 << 20)

    out = pl.pallas_call(
        functools.partial(mlp_kernel, ew_dtype=ew_dtype),
        out_shape=jax.ShapeDtypeStruct((b_pad, n_out_pad), jnp.bfloat16),
        grid_spec=pltpu.PrefetchScalarGridSpec(
            num_scalar_prefetch=0,
            grid=(n_tiles,),
            in_specs=in_specs,
            out_specs=out_spec,
        ),
        compiler_params=pltpu.CompilerParams(
            dimension_semantics=("parallel",),
            vmem_limit_bytes=vmem_limit,
        ),
        cost_estimate=cost,
    )(x_p, *flat_params)

    return out[:B, :nb_actions].astype(jnp.float32)


# ---------------------------------------------------------------------------
# init + reference
# ---------------------------------------------------------------------------
def init_params(key, state_dim, nb_neurons, nb_actions, num_layers):
    """Deterministic init mimicking torch.nn.Linear default (Kaiming-uniform-ish).

    Returns list of (W, b) with W already transposed to (in, out), f32.
    """
    dims = [state_dim] + [nb_neurons] * (num_layers + 1) + [nb_actions]
    params = []
    for i in range(len(dims) - 1):
        fan_in, fan_out = dims[i], dims[i + 1]
        key, kw, kb = jax.random.split(key, 3)
        bound = 1.0 / jnp.sqrt(fan_in)
        w = jax.random.uniform(kw, (fan_in, fan_out), jnp.float32, -bound, bound)
        b = jax.random.uniform(kb, (1, fan_out), jnp.float32, -bound, bound)
        params.append((w, b))
    return params


def mlp_reference(x, params, ew_dtype):
    """Pure-JAX reference mirroring the kernel's dtype policy (bf16 MXU operands,
    f32 accumulate, `ew_dtype` bias/ReLU, bf16 output store).  Deliberate precision
    tradeoff vs a pure-f32 torch MLP, covered by the test tolerance."""
    h = x.astype(jnp.bfloat16)
    n = len(params)
    for i, (w, b) in enumerate(params):
        acc = jnp.dot(h, w.astype(jnp.bfloat16), preferred_element_type=jnp.float32)
        acc = acc.astype(ew_dtype) + b.astype(ew_dtype)
        if i < n - 1:
            acc = jnp.maximum(acc, 0.0)
            h = acc.astype(jnp.bfloat16)
        else:
            h = acc
    return h.astype(jnp.bfloat16).astype(jnp.float32)


if __name__ == "__main__":
    key = jax.random.PRNGKey(0)
    kp, kx = jax.random.split(key)

    ew_dtype = _elementwise_dtype(_device_kind())

    params = init_params(kp, STATE_DIM, NB_NEURONS, NB_ACTIONS, NUM_HIDDEN_LAYERS)
    prepared = prepare_params(params, ew_dtype)

    batch = 10  # small; not a multiple of 8 -> exercises batch / feature / output padding
    x = jax.random.normal(kx, (batch, STATE_DIM), jnp.float32)

    out = mlp_forward(x, prepared, NB_ACTIONS, ew_dtype=ew_dtype)
    out = jax.block_until_ready(out)

    ref = mlp_reference(x, params, ew_dtype)
    assert out.shape == (batch, NB_ACTIONS), out.shape
    assert jnp.allclose(out, ref, atol=1e-2, rtol=1e-2), "mismatch vs reference"

    print("KERNEL_OK")
</pallas_src>

<mosaic_0001>
module attributes {stable_mosaic.version = 11 : i64} {
  func.func @mlp_kernel(%arg0: i32, %arg1: memref<16x8xbf16, #tpu.memory_space<vmem>>, %arg2: memref<8x256xbf16, #tpu.memory_space<vmem>>, %arg3: memref<1x256xf32, #tpu.memory_space<vmem>>, %arg4: memref<256x256xbf16, #tpu.memory_space<vmem>>, %arg5: memref<1x256xf32, #tpu.memory_space<vmem>>, %arg6: memref<256x256xbf16, #tpu.memory_space<vmem>>, %arg7: memref<1x256xf32, #tpu.memory_space<vmem>>, %arg8: memref<256x256xbf16, #tpu.memory_space<vmem>>, %arg9: memref<1x256xf32, #tpu.memory_space<vmem>>, %arg10: memref<256x256xbf16, #tpu.memory_space<vmem>>, %arg11: memref<1x256xf32, #tpu.memory_space<vmem>>, %arg12: memref<256x128xbf16, #tpu.memory_space<vmem>>, %arg13: memref<1x128xf32, #tpu.memory_space<vmem>>, %arg14: memref<16x128xbf16, #tpu.memory_space<vmem>>) attributes {dimension_semantics = [#tpu.dimension_semantics<parallel>], iteration_bounds = array<i64: 1>, scalar_prefetch = 0 : i64, scratch_operands = 0 : i64, tpu.core_type = #tpu.core_type<tc>, window_params = [{transform_indices = @transform_0, window_bounds = array<i64: 16, 8>}, {pipeline_mode = #tpu.pipeline_mode<synchronous>, transform_indices = @transform_1, window_bounds = array<i64: 8, 256>}, {pipeline_mode = #tpu.pipeline_mode<synchronous>, transform_indices = @transform_2, window_bounds = array<i64: 1, 256>}, {pipeline_mode = #tpu.pipeline_mode<synchronous>, transform_indices = @transform_3, window_bounds = array<i64: 256, 256>}, {pipeline_mode = #tpu.pipeline_mode<synchronous>, transform_indices = @transform_4, window_bounds = array<i64: 1, 256>}, {pipeline_mode = #tpu.pipeline_mode<synchronous>, transform_indices = @transform_5, window_bounds = array<i64: 256, 256>}, {pipeline_mode = #tpu.pipeline_mode<synchronous>, transform_indices = @transform_6, window_bounds = array<i64: 1, 256>}, {pipeline_mode = #tpu.pipeline_mode<synchronous>, transform_indices = @transform_7, window_bounds = array<i64: 256, 256>}, {pipeline_mode = #tpu.pipeline_mode<synchronous>, transform_indices = @transform_8, window_bounds = array<i64: 1, 256>}, {pipeline_mode = #tpu.pipeline_mode<synchronous>, transform_indices = @transform_9, window_bounds = array<i64: 256, 256>}, {pipeline_mode = #tpu.pipeline_mode<synchronous>, transform_indices = @transform_10, window_bounds = array<i64: 1, 256>}, {pipeline_mode = #tpu.pipeline_mode<synchronous>, transform_indices = @transform_11, window_bounds = array<i64: 256, 128>}, {pipeline_mode = #tpu.pipeline_mode<synchronous>, transform_indices = @transform_12, window_bounds = array<i64: 1, 128>}, {transform_indices = @transform_13, window_bounds = array<i64: 16, 128>}]} {
    %c0 = arith.constant 0 : index
    %c0_0 = arith.constant 0 : index
    %0 = vector.load %arg1[%c0, %c0_0] : memref<16x8xbf16, #tpu.memory_space<vmem>>, vector<16x8xbf16>
    %c0_1 = arith.constant 0 : index
    %c0_2 = arith.constant 0 : index
    %1 = vector.load %arg2[%c0_1, %c0_2] : memref<8x256xbf16, #tpu.memory_space<vmem>>, vector<8x256xbf16>
    %c0_3 = arith.constant 0 : index
    %c0_4 = arith.constant 0 : index
    %2 = vector.load %arg3[%c0_3, %c0_4] : memref<1x256xf32, #tpu.memory_space<vmem>>, vector<1x256xf32>
    %cst = arith.constant dense<0.000000e+00> : vector<16x256xf32>
    %3 = tpu.matmul %0, %1, %cst {dimension_numbers = #tpu.dot_dimension_numbers<[1], [0], [0], [1], [0, 0, 1, 1], [], []>} : vector<16x8xbf16>, vector<8x256xbf16>, vector<16x256xf32> -> vector<16x256xf32>
    %4 = vector.broadcast %2 : vector<1x256xf32> to vector<16x256xf32>
    %5 = arith.addf %3, %4 : vector<16x256xf32>
    %cst_5 = arith.constant 0.000000e+00 : f32
    %6 = vector.broadcast %cst_5 : f32 to vector<16x256xf32>
    %7 = arith.maximumf %5, %6 : vector<16x256xf32>
    %8 = arith.truncf %7 : vector<16x256xf32> to vector<16x256xbf16>
    %c0_6 = arith.constant 0 : index
    %c0_7 = arith.constant 0 : index
    %9 = vector.load %arg4[%c0_6, %c0_7] : memref<256x256xbf16, #tpu.memory_space<vmem>>, vector<256x256xbf16>
    %c0_8 = arith.constant 0 : index
    %c0_9 = arith.constant 0 : index
    %10 = vector.load %arg5[%c0_8, %c0_9] : memref<1x256xf32, #tpu.memory_space<vmem>>, vector<1x256xf32>
    %cst_10 = arith.constant dense<0.000000e+00> : vector<16x256xf32>
    %11 = tpu.matmul %8, %9, %cst_10 {dimension_numbers = #tpu.dot_dimension_numbers<[1], [0], [0], [1], [0, 0, 1, 1], [], []>} : vector<16x256xbf16>, vector<256x256xbf16>, vector<16x256xf32> -> vector<16x256xf32>
    %12 = vector.broadcast %10 : vector<1x256xf32> to vector<16x256xf32>
    %13 = arith.addf %11, %12 : vector<16x256xf32>
    %cst_11 = arith.constant 0.000000e+00 : f32
    %14 = vector.broadcast %cst_11 : f32 to vector<16x256xf32>
    %15 = arith.maximumf %13, %14 : vector<16x256xf32>
    %16 = arith.truncf %15 : vector<16x256xf32> to vector<16x256xbf16>
    %c0_12 = arith.constant 0 : index
    %c0_13 = arith.constant 0 : index
    %17 = vector.load %arg6[%c0_12, %c0_13] : memref<256x256xbf16, #tpu.memory_space<vmem>>, vector<256x256xbf16>
    %c0_14 = arith.constant 0 : index
    %c0_15 = arith.constant 0 : index
    %18 = vector.load %arg7[%c0_14, %c0_15] : memref<1x256xf32, #tpu.memory_space<vmem>>, vector<1x256xf32>
    %cst_16 = arith.constant dense<0.000000e+00> : vector<16x256xf32>
    %19 = tpu.matmul %16, %17, %cst_16 {dimension_numbers = #tpu.dot_dimension_numbers<[1], [0], [0], [1], [0, 0, 1, 1], [], []>} : vector<16x256xbf16>, vector<256x256xbf16>, vector<16x256xf32> -> vector<16x256xf32>
    %20 = vector.broadcast %18 : vector<1x256xf32> to vector<16x256xf32>
    %21 = arith.addf %19, %20 : vector<16x256xf32>
    %cst_17 = arith.constant 0.000000e+00 : f32
    %22 = vector.broadcast %cst_17 : f32 to vector<16x256xf32>
    %23 = arith.maximumf %21, %22 : vector<16x256xf32>
    %24 = arith.truncf %23 : vector<16x256xf32> to vector<16x256xbf16>
    %c0_18 = arith.constant 0 : index
    %c0_19 = arith.constant 0 : index
    %25 = vector.load %arg8[%c0_18, %c0_19] : memref<256x256xbf16, #tpu.memory_space<vmem>>, vector<256x256xbf16>
    %c0_20 = arith.constant 0 : index
    %c0_21 = arith.constant 0 : index
    %26 = vector.load %arg9[%c0_20, %c0_21] : memref<1x256xf32, #tpu.memory_space<vmem>>, vector<1x256xf32>
    %cst_22 = arith.constant dense<0.000000e+00> : vector<16x256xf32>
    %27 = tpu.matmul %24, %25, %cst_22 {dimension_numbers = #tpu.dot_dimension_numbers<[1], [0], [0], [1], [0, 0, 1, 1], [], []>} : vector<16x256xbf16>, vector<256x256xbf16>, vector<16x256xf32> -> vector<16x256xf32>
    %28 = vector.broadcast %26 : vector<1x256xf32> to vector<16x256xf32>
    %29 = arith.addf %27, %28 : vector<16x256xf32>
    %cst_23 = arith.constant 0.000000e+00 : f32
    %30 = vector.broadcast %cst_23 : f32 to vector<16x256xf32>
    %31 = arith.maximumf %29, %30 : vector<16x256xf32>
    %32 = arith.truncf %31 : vector<16x256xf32> to vector<16x256xbf16>
    %c0_24 = arith.constant 0 : index
    %c0_25 = arith.constant 0 : index
    %33 = vector.load %arg10[%c0_24, %c0_25] : memref<256x256xbf16, #tpu.memory_space<vmem>>, vector<256x256xbf16>
    %c0_26 = arith.constant 0 : index
    %c0_27 = arith.constant 0 : index
    %34 = vector.load %arg11[%c0_26, %c0_27] : memref<1x256xf32, #tpu.memory_space<vmem>>, vector<1x256xf32>
    %cst_28 = arith.constant dense<0.000000e+00> : vector<16x256xf32>
    %35 = tpu.matmul %32, %33, %cst_28 {dimension_numbers = #tpu.dot_dimension_numbers<[1], [0], [0], [1], [0, 0, 1, 1], [], []>} : vector<16x256xbf16>, vector<256x256xbf16>, vector<16x256xf32> -> vector<16x256xf32>
    %36 = vector.broadcast %34 : vector<1x256xf32> to vector<16x256xf32>
    %37 = arith.addf %35, %36 : vector<16x256xf32>
    %cst_29 = arith.constant 0.000000e+00 : f32
    %38 = vector.broadcast %cst_29 : f32 to vector<16x256xf32>
    %39 = arith.maximumf %37, %38 : vector<16x256xf32>
    %40 = arith.truncf %39 : vector<16x256xf32> to vector<16x256xbf16>
    %c0_30 = arith.constant 0 : index
    %c0_31 = arith.constant 0 : index
    %41 = vector.load %arg12[%c0_30, %c0_31] : memref<256x128xbf16, #tpu.memory_space<vmem>>, vector<256x128xbf16>
    %c0_32 = arith.constant 0 : index
    %c0_33 = arith.constant 0 : index
    %42 = vector.load %arg13[%c0_32, %c0_33] : memref<1x128xf32, #tpu.memory_space<vmem>>, vector<1x128xf32>
    %cst_34 = arith.constant dense<0.000000e+00> : vector<16x128xf32>
    %43 = tpu.matmul %40, %41, %cst_34 {dimension_numbers = #tpu.dot_dimension_numbers<[1], [0], [0], [1], [0, 0, 1, 1], [], []>} : vector<16x256xbf16>, vector<256x128xbf16>, vector<16x128xf32> -> vector<16x128xf32>
    %44 = vector.broadcast %42 : vector<1x128xf32> to vector<16x128xf32>
    %45 = arith.addf %43, %44 : vector<16x128xf32>
    %46 = arith.truncf %45 : vector<16x128xf32> to vector<16x128xbf16>
    %c0_35 = arith.constant 0 : index
    %c0_36 = arith.constant 0 : index
    %47 = vector.load %arg14[%c0_35, %c0_36] : memref<16x128xbf16, #tpu.memory_space<vmem>>, vector<16x128xbf16>
    tpu.vector_store %arg14[%c0_35, %c0_36], %46 {strides = array<i32>} : memref<16x128xbf16, #tpu.memory_space<vmem>>, vector<16x128xbf16>,
    return
  }
  func.func @transform_0(%arg0: i32) -> (i32, i32) {
    %c0_i32 = arith.constant 0 : i32
    %c0_i32_0 = arith.constant 0 : i32
    return %arg0, %c0_i32 : i32, i32
  }
  func.func @transform_1(%arg0: i32) -> (i32, i32) {
    %c0_i32 = arith.constant 0 : i32
    %c0_i32_0 = arith.constant 0 : i32
    %c0_i32_1 = arith.constant 0 : i32
    return %c0_i32, %c0_i32_0 : i32, i32
  }
  func.func @transform_2(%arg0: i32) -> (i32, i32) {
    %c0_i32 = arith.constant 0 : i32
    %c0_i32_0 = arith.constant 0 : i32
    %c0_i32_1 = arith.constant 0 : i32
    return %c0_i32, %c0_i32_0 : i32, i32
  }
  func.func @transform_3(%arg0: i32) -> (i32, i32) {
    %c0_i32 = arith.constant 0 : i32
    %c0_i32_0 = arith.constant 0 : i32
    %c0_i32_1 = arith.constant 0 : i32
    return %c0_i32, %c0_i32_0 : i32, i32
  }
  func.func @transform_4(%arg0: i32) -> (i32, i32) {
    %c0_i32 = arith.constant 0 : i32
    %c0_i32_0 = arith.constant 0 : i32
    %c0_i32_1 = arith.constant 0 : i32
    return %c0_i32, %c0_i32_0 : i32, i32
  }
  func.func @transform_5(%arg0: i32) -> (i32, i32) {
    %c0_i32 = arith.constant 0 : i32
    %c0_i32_0 = arith.constant 0 : i32
    %c0_i32_1 = arith.constant 0 : i32
    return %c0_i32, %c0_i32_0 : i32, i32
  }
  func.func @transform_6(%arg0: i32) -> (i32, i32) {
    %c0_i32 = arith.constant 0 : i32
    %c0_i32_0 = arith.constant 0 : i32
    %c0_i32_1 = arith.constant 0 : i32
    return %c0_i32, %c0_i32_0 : i32, i32
  }
  func.func @transform_7(%arg0: i32) -> (i32, i32) {
    %c0_i32 = arith.constant 0 : i32
    %c0_i32_0 = arith.constant 0 : i32
    %c0_i32_1 = arith.constant 0 : i32
    return %c0_i32, %c0_i32_0 : i32, i32
  }
  func.func @transform_8(%arg0: i32) -> (i32, i32) {
    %c0_i32 = arith.constant 0 : i32
    %c0_i32_0 = arith.constant 0 : i32
    %c0_i32_1 = arith.constant 0 : i32
    return %c0_i32, %c0_i32_0 : i32, i32
  }
  func.func @transform_9(%arg0: i32) -> (i32, i32) {
    %c0_i32 = arith.constant 0 : i32
    %c0_i32_0 = arith.constant 0 : i32
    %c0_i32_1 = arith.constant 0 : i32
    return %c0_i32, %c0_i32_0 : i32, i32
  }
  func.func @transform_10(%arg0: i32) -> (i32, i32) {
    %c0_i32 = arith.constant 0 : i32
    %c0_i32_0 = arith.constant 0 : i32
    %c0_i32_1 = arith.constant 0 : i32
    return %c0_i32, %c0_i32_0 : i32, i32
  }
  func.func @transform_11(%arg0: i32) -> (i32, i32) {
    %c0_i32 = arith.constant 0 : i32
    %c0_i32_0 = arith.constant 0 : i32
    %c0_i32_1 = arith.constant 0 : i32
    return %c0_i32, %c0_i32_0 : i32, i32
  }
  func.func @transform_12(%arg0: i32) -> (i32, i32) {
    %c0_i32 = arith.constant 0 : i32
    %c0_i32_0 = arith.constant 0 : i32
    %c0_i32_1 = arith.constant 0 : i32
    return %c0_i32, %c0_i32_0 : i32, i32
  }
  func.func @transform_13(%arg0: i32) -> (i32, i32) {
    %c0_i32 = arith.constant 0 : i32
    %c0_i32_0 = arith.constant 0 : i32
    return %arg0, %c0_i32 : i32, i32
  }
}

</mosaic_0001>

<llo_original>
// kernel: tpu_custom_call.1
$region0: #{tpu_custom_call.1}
  #allocation0 [shape = 'u32[]', space=smem, size = 0x4, offset = 0x4, fixed_abs, tag = 'smem constant byte address 0x4 - core index']
  #allocation1 [shape = 'u32[144,128]{1,0:T(1,128)}', space=vmem, size = 0x12000, scoped, tag = 'internal scratch']
  %s0 = inlined_call_operand.hbm [shape: bf16[16,8], index: 0, kind: input, shape index: {}]
  %s1 = inlined_call_operand.hbm [shape: bf16[8,256], index: 1, kind: input, shape index: {}]
  %s2 = inlined_call_operand.hbm [shape: f32[1,256], index: 2, kind: input, shape index: {}]
  %s3 = inlined_call_operand.hbm [shape: bf16[256,256], index: 3, kind: input, shape index: {}]
  %s4 = inlined_call_operand.hbm [shape: f32[1,256], index: 4, kind: input, shape index: {}]
  %s5 = inlined_call_operand.hbm [shape: bf16[256,256], index: 5, kind: input, shape index: {}]
  %s6 = inlined_call_operand.hbm [shape: f32[1,256], index: 6, kind: input, shape index: {}]
  %s7 = inlined_call_operand.hbm [shape: bf16[256,256], index: 7, kind: input, shape index: {}]
  %s8 = inlined_call_operand.hbm [shape: f32[1,256], index: 8, kind: input, shape index: {}]
  %s9 = inlined_call_operand.hbm [shape: bf16[256,256], index: 9, kind: input, shape index: {}]
  %s10 = inlined_call_operand.hbm [shape: f32[1,256], index: 10, kind: input, shape index: {}]
  %s11 = inlined_call_operand.hbm [shape: bf16[256,128], index: 11, kind: input, shape index: {}]
  %s12 = inlined_call_operand.hbm [shape: f32[1,128], index: 12, kind: input, shape index: {}]
  %s13 = inlined_call_operand.hbm [shape: bf16[16,128], index: 13, kind: output, shape index: {}]
  %s14 = sld [smem:[#allocation0]]
  $region114: #{tpu_custom_call.1} parent=0
    _
  %s16 = ssub.s32 1, %s14
  %s17 = scalar_select 0, %s16, %s14
  $region1: #{tpu_custom_call.1} parent=0
    #allocation2 [shape = 'u8[4096]{0}', space=vmem, size = 0x1000, scoped, tag = 'input window, operand 0, single buffered']
    #allocation3 [shape = 's32[1]{0}', space=sflag, size = 0x4, scoped, tag = 'scoped memory for tpu_custom_call.1']
    #allocation4 [shape = 's32[1]{0}', space=sflag, size = 0x4, scoped, tag = 'scoped memory for tpu_custom_call.1']
    #allocation5 [shape = 'u8[4096]{0}', space=vmem, size = 0x1000, scoped, tag = 'input window, operand 1, single buffered']
    #allocation6 [shape = 's32[1]{0}', space=sflag, size = 0x4, scoped, tag = 'scoped memory for tpu_custom_call.1']
    #allocation7 [shape = 'u8[1024]{0}', space=vmem, size = 0x400, scoped, tag = 'input window, operand 2, single buffered']
    #allocation8 [shape = 'u8[131072]{0}', space=vmem, size = 0x20000, scoped, tag = 'input window, operand 3, single buffered']
    #allocation9 [shape = 's32[1]{0}', space=sflag, size = 0x4, scoped, tag = 'scoped memory for tpu_custom_call.1']
    #allocation10 [shape = 'u8[1024]{0}', space=vmem, size = 0x400, scoped, tag = 'input window, operand 4, single buffered']
    #allocation11 [shape = 'u8[131072]{0}', space=vmem, size = 0x20000, scoped, tag = 'input window, operand 5, single buffered']
    #allocation12 [shape = 's32[1]{0}', space=sflag, size = 0x4, scoped, tag = 'scoped memory for tpu_custom_call.1']
    #allocation13 [shape = 'u8[1024]{0}', space=vmem, size = 0x400, scoped, tag = 'input window, operand 6, single buffered']
    #allocation14 [shape = 'u8[131072]{0}', space=vmem, size = 0x20000, scoped, tag = 'input window, operand 7, single buffered']
    #allocation15 [shape = 's32[1]{0}', space=sflag, size = 0x4, scoped, tag = 'scoped memory for tpu_custom_call.1']
    #allocation16 [shape = 'u8[1024]{0}', space=vmem, size = 0x400, scoped, tag = 'input window, operand 8, single buffered']
    #allocation17 [shape = 'u8[131072]{0}', space=vmem, size = 0x20000, scoped, tag = 'input window, operand 9, single buffered']
    #allocation18 [shape = 's32[1]{0}', space=sflag, size = 0x4, scoped, tag = 'scoped memory for tpu_custom_call.1']
    #allocation19 [shape = 'u8[1024]{0}', space=vmem, size = 0x400, scoped, tag = 'input window, operand 10, single buffered']
    #allocation20 [shape = 'u8[65536]{0}', space=vmem, size = 0x10000, scoped, tag = 'input window, operand 11, single buffered']
    #allocation21 [shape = 's32[1]{0}', space=sflag, size = 0x4, scoped, tag = 'scoped memory for tpu_custom_call.1']
    #allocation22 [shape = 'u8[512]{0}', space=vmem, size = 0x400, scoped, tag = 'input window, operand 12, single buffered']
    #allocation23 [shape = 'u8[4096]{0}', space=vmem, size = 0x1000, scoped, tag = 'output window, operand 0, single buffered']
    %18 = vsyncpa [#allocation3], 0
    %19 = vsyncpa [#allocation6], 0
    %20 = vsyncpa [#allocation9], 0
    %21 = vsyncpa [#allocation12], 0
    %22 = vsyncpa [#allocation15], 0
    %23 = vsyncpa [#allocation18], 0
    %24 = vsyncpa [#allocation21], 0
    %25 = vsyncpa [#allocation4], 0
    // Predicated region
    $region2: #{tpu_custom_call.1} parent=1 // pred_check
      _
    $region3: #{tpu_custom_call.1} parent=1 // pred_check_branch
      %27 = sbr.rel (0) target = $region5
    $region4: #{tpu_custom_call.1} parent=1 // pred_region
      %s29 = ssub.s32 128, 128
      %30 = vsyncadd [#allocation3], %s29
      %s31 = sshll.u32 [#allocation2], 4
      %s32 = int_to_ptr.vmem [resolvable:$true] %s31
      %37 = dma.hbm_to_vmem [thread:$0]  %s0, 128, %s32, [#allocation3], 64, 64, 4
    $region5: #{tpu_custom_call.1} parent=1 // pred_fallthru
      _
    // Predicated region
    $region6: #{tpu_custom_call.1} parent=1 // pred_check
      _
    $region7: #{tpu_custom_call.1} parent=1 // pred_check_branch
      %39 = sbr.rel (0) target = $region9
    $region8: #{tpu_custom_call.1} parent=1 // pred_region
      %s41 = ssub.s32 128, 128
      %42 = vsyncadd [#allocation6], %s41
      %s44 = sshll.u32 [#allocation5], 4
      %s45 = int_to_ptr.vmem [resolvable:$true] %s44
      %47 = dma.hbm_to_vmem [thread:$0]  %s1, 128, %s45, [#allocation6]
    $region9: #{tpu_custom_call.1} parent=1 // pred_fallthru
      _
    // Predicated region
    $region10: #{tpu_custom_call.1} parent=1 // pred_check
      _
    $region11: #{tpu_custom_call.1} parent=1 // pred_check_branch
      %49 = sbr.rel (0) target = $region13
    $region12: #{tpu_custom_call.1} parent=1 // pred_region
      %s51 = ssub.s32 32, 32
      %52 = vsyncadd [#allocation6], %s51
      %s54 = sshll.u32 [#allocation7], 4
      %s55 = int_to_ptr.vmem [resolvable:$true] %s54
      %57 = dma.hbm_to_vmem [thread:$0]  %s2, 32, %s55, [#allocation6]
    $region13: #{tpu_custom_call.1} parent=1 // pred_fallthru
      _
    // Predicated region
    $region14: #{tpu_custom_call.1} parent=1 // pred_check
      _
    $region15: #{tpu_custom_call.1} parent=1 // pred_check_branch
      %59 = sbr.rel (0) target = $region17
    $region16: #{tpu_custom_call.1} parent=1 // pred_region
      %s61 = ssub.s32 4096, 4096
      %62 = vsyncadd [#allocation9], %s61
      %s63 = sshll.u32 [#allocation8], 4
      %s64 = int_to_ptr.vmem [resolvable:$true] %s63
      %69 = dma.hbm_to_vmem [thread:$0]  %s3, 4096, %s64, [#allocation9], 128, 128, 8
    $region17: #{tpu_custom_call.1} parent=1 // pred_fallthru
      _
    // Predicated region
    $region18: #{tpu_custom_call.1} parent=1 // pred_check
      _
    $region19: #{tpu_custom_call.1} parent=1 // pred_check_branch
      %71 = sbr.rel (0) target = $region21
    $region20: #{tpu_custom_call.1} parent=1 // pred_region
      %s73 = ssub.s32 32, 32
      %74 = vsyncadd [#allocation9], %s73
      %s76 = sshll.u32 [#allocation10], 4
      %s77 = int_to_ptr.vmem [resolvable:$true] %s76
      %79 = dma.hbm_to_vmem [thread:$0]  %s4, 32, %s77, [#allocation9]
    $region21: #{tpu_custom_call.1} parent=1 // pred_fallthru
      _
    // Predicated region
    $region22: #{tpu_custom_call.1} parent=1 // pred_check
      _
    $region23: #{tpu_custom_call.1} parent=1 // pred_check_branch
      %81 = sbr.rel (0) target = $region25
    $region24: #{tpu_custom_call.1} parent=1 // pred_region
      %s83 = ssub.s32 4096, 4096
      %84 = vsyncadd [#allocation12], %s83
      %s85 = sshll.u32 [#allocation11], 4
      %s86 = int_to_ptr.vmem [resolvable:$true] %s85
      %91 = dma.hbm_to_vmem [thread:$0]  %s5, 4096, %s86, [#allocation12], 128, 128, 8
    $region25: #{tpu_custom_call.1} parent=1 // pred_fallthru
      _
    // Predicated region
    $region26: #{tpu_custom_call.1} parent=1 // pred_check
      _
    $region27: #{tpu_custom_call.1} parent=1 // pred_check_branch
      %93 = sbr.rel (0) target = $region29
    $region28: #{tpu_custom_call.1} parent=1 // pred_region
      %s95 = ssub.s32 32, 32
      %96 = vsyncadd [#allocation12], %s95
      %s98 = sshll.u32 [#allocation13], 4
      %s99 = int_to_ptr.vmem [resolvable:$true] %s98
      %101 = dma.hbm_to_vmem [thread:$0]  %s6, 32, %s99, [#allocation12]
    $region29: #{tpu_custom_call.1} parent=1 // pred_fallthru
      _
    // Predicated region
    $region30: #{tpu_custom_call.1} parent=1 // pred_check
      _
    $region31: #{tpu_custom_call.1} parent=1 // pred_check_branch
      %103 = sbr.rel (0) target = $region33
    $region32: #{tpu_custom_call.1} parent=1 // pred_region
      %s105 = ssub.s32 4096, 4096
      %106 = vsyncadd [#allocation15], %s105
      %s107 = sshll.u32 [#allocation14], 4
      %s108 = int_to_ptr.vmem [resolvable:$true] %s107
      %113 = dma.hbm_to_vmem [thread:$0]  %s7, 4096, %s108, [#allocation15], 128, 128, 8
    $region33: #{tpu_custom_call.1} parent=1 // pred_fallthru
      _
    // Predicated region
    $region34: #{tpu_custom_call.1} parent=1 // pred_check
      _
    $region35: #{tpu_custom_call.1} parent=1 // pred_check_branch
      %115 = sbr.rel (0) target = $region37
    $region36: #{tpu_custom_call.1} parent=1 // pred_region
      %s117 = ssub.s32 32, 32
      %118 = vsyncadd [#allocation15], %s117
      %s120 = sshll.u32 [#allocation16], 4
      %s121 = int_to_ptr.vmem [resolvable:$true] %s120
      %123 = dma.hbm_to_vmem [thread:$0]  %s8, 32, %s121, [#allocation15]
    $region37: #{tpu_custom_call.1} parent=1 // pred_fallthru
      _
    // Predicated region
    $region38: #{tpu_custom_call.1} parent=1 // pred_check
      _
    $region39: #{tpu_custom_call.1} parent=1 // pred_check_branch
      %125 = sbr.rel (0) target = $region41
    $region40: #{tpu_custom_call.1} parent=1 // pred_region
      %s127 = ssub.s32 4096, 4096
      %128 = vsyncadd [#allocation18], %s127
      %s129 = sshll.u32 [#allocation17], 4
      %s130 = int_to_ptr.vmem [resolvable:$true] %s129
      %135 = dma.hbm_to_vmem [thread:$0]  %s9, 4096, %s130, [#allocation18], 128, 128, 8
    $region41: #{tpu_custom_call.1} parent=1 // pred_fallthru
      _
    // Predicated region
    $region42: #{tpu_custom_call.1} parent=1 // pred_check
      _
    $region43: #{tpu_custom_call.1} parent=1 // pred_check_branch
      %137 = sbr.rel (0) target = $region45
    $region44: #{tpu_custom_call.1} parent=1 // pred_region
      %s139 = ssub.s32 32, 32
      %140 = vsyncadd [#allocation18], %s139
      %s142 = sshll.u32 [#allocation19], 4
      %s143 = int_to_ptr.vmem [resolvable:$true] %s142
      %145 = dma.hbm_to_vmem [thread:$0]  %s10, 32, %s143, [#allocation18]
    $region45: #{tpu_custom_call.1} parent=1 // pred_fallthru
      _
    // Predicated region
    $region46: #{tpu_custom_call.1} parent=1 // pred_check
      _
    $region47: #{tpu_custom_call.1} parent=1 // pred_check_branch
      %147 = sbr.rel (0) target = $region49
    $region48: #{tpu_custom_call.1} parent=1 // pred_region
      %s149 = ssub.s32 2048, 2048
      %150 = vsyncadd [#allocation21], %s149
      %s151 = sshll.u32 [#allocation20], 4
      %s152 = int_to_ptr.vmem [resolvable:$true] %s151
      %157 = dma.hbm_to_vmem [thread:$0]  %s11, 2048, %s152, [#allocation21], 64, 64, 4
    $region49: #{tpu_custom_call.1} parent=1 // pred_fallthru
      _
    // Predicated region
    $region50: #{tpu_custom_call.1} parent=1 // pred_check
      _
    $region51: #{tpu_custom_call.1} parent=1 // pred_check_branch
      %159 = sbr.rel (0) target = $region53
    $region52: #{tpu_custom_call.1} parent=1 // pred_region
      %s161 = ssub.s32 16, 16
      %162 = vsyncadd [#allocation21], %s161
      %s164 = sshll.u32 [#allocation22], 4
      %s165 = int_to_ptr.vmem [resolvable:$true] %s164
      %167 = dma.hbm_to_vmem [thread:$0]  %s12, 16, %s165, [#allocation21]
    $region53: #{tpu_custom_call.1} parent=1 // pred_fallthru
      _
    // Predicated region
    $region54: #{tpu_custom_call.1} parent=1 // pred_check
      _
    $region55: #{tpu_custom_call.1} parent=1 // pred_check_branch
      %169 = sbr.rel (0) target = $region57
    $region56: #{tpu_custom_call.1} parent=1 // pred_region
      %170 = dma.done [#allocation3], 128
    $region57: #{tpu_custom_call.1} parent=1 // pred_fallthru
      _
    // Predicated region
    $region58: #{tpu_custom_call.1} parent=1 // pred_check
      _
    $region59: #{tpu_custom_call.1} parent=1 // pred_check_branch
      %172 = sbr.rel (0) target = $region61
    $region60: #{tpu_custom_call.1} parent=1 // pred_region
      %173 = dma.done [#allocation6], 128
    $region61: #{tpu_custom_call.1} parent=1 // pred_fallthru
      _
    // Predicated region
    $region62: #{tpu_custom_call.1} parent=1 // pred_check
      _
    $region63: #{tpu_custom_call.1} parent=1 // pred_check_branch
      %175 = sbr.rel (0) target = $region65
    $region64: #{tpu_custom_call.1} parent=1 // pred_region
      %176 = dma.done [#allocation6], 32
    $region65: #{tpu_custom_call.1} parent=1 // pred_fallthru
      _
    // Predicated region
    $region66: #{tpu_custom_call.1} parent=1 // pred_check
      _
    $region67: #{tpu_custom_call.1} parent=1 // pred_check_branch
      %178 = sbr.rel (0) target = $region69
    $region68: #{tpu_custom_call.1} parent=1 // pred_region
      %179 = dma.done [#allocation9], 4096
    $region69: #{tpu_custom_call.1} parent=1 // pred_fallthru
      _
    // Predicated region
    $region70: #{tpu_custom_call.1} parent=1 // pred_check
      _
    $region71: #{tpu_custom_call.1} parent=1 // pred_check_branch
      %181 = sbr.rel (0) target = $region73
    $region72: #{tpu_custom_call.1} parent=1 // pred_region
      %182 = dma.done [#allocation9], 32
    $region73: #{tpu_custom_call.1} parent=1 // pred_fallthru
      _
    // Predicated region
    $region74: #{tpu_custom_call.1} parent=1 // pred_check
      _
    $region75: #{tpu_custom_call.1} parent=1 // pred_check_branch
      %184 = sbr.rel (0) target = $region77
    $region76: #{tpu_custom_call.1} parent=1 // pred_region
      %185 = dma.done [#allocation12], 4096
    $region77: #{tpu_custom_call.1} parent=1 // pred_fallthru
      _
    // Predicated region
    $region78: #{tpu_custom_call.1} parent=1 // pred_check
      _
    $region79: #{tpu_custom_call.1} parent=1 // pred_check_branch
      %187 = sbr.rel (0) target = $region81
    $region80: #{tpu_custom_call.1} parent=1 // pred_region
      %188 = dma.done [#allocation12], 32
    $region81: #{tpu_custom_call.1} parent=1 // pred_fallthru
      _
    // Predicated region
    $region82: #{tpu_custom_call.1} parent=1 // pred_check
      _
    $region83: #{tpu_custom_call.1} parent=1 // pred_check_branch
      %190 = sbr.rel (0) target = $region85
    $region84: #{tpu_custom_call.1} parent=1 // pred_region
      %191 = dma.done [#allocation15], 4096
    $region85: #{tpu_custom_call.1} parent=1 // pred_fallthru
      _
    // Predicated region
    $region86: #{tpu_custom_call.1} parent=1 // pred_check
      _
    $region87: #{tpu_custom_call.1} parent=1 // pred_check_branch
      %193 = sbr.rel (0) target = $region89
    $region88: #{tpu_custom_call.1} parent=1 // pred_region
      %194 = dma.done [#allocation15], 32
    $region89: #{tpu_custom_call.1} parent=1 // pred_fallthru
      _
    // Predicated region
    $region90: #{tpu_custom_call.1} parent=1 // pred_check
      _
    $region91: #{tpu_custom_call.1} parent=1 // pred_check_branch
      %196 = sbr.rel (0) target = $region93
    $region92: #{tpu_custom_call.1} parent=1 // pred_region
      %197 = dma.done [#allocation18], 4096
    $region93: #{tpu_custom_call.1} parent=1 // pred_fallthru
      _
    // Predicated region
    $region94: #{tpu_custom_call.1} parent=1 // pred_check
      _
    $region95: #{tpu_custom_call.1} parent=1 // pred_check_branch
      %199 = sbr.rel (0) target = $region97
    $region96: #{tpu_custom_call.1} parent=1 // pred_region
      %200 = dma.done [#allocation18], 32
    $region97: #{tpu_custom_call.1} parent=1 // pred_fallthru
      _
    // Predicated region
    $region98: #{tpu_custom_call.1} parent=1 // pred_check
      _
    $region99: #{tpu_custom_call.1} parent=1 // pred_check_branch
      %202 = sbr.rel (0) target = $region101
    $region100: #{tpu_custom_call.1} parent=1 // pred_region
      %203 = dma.done [#allocation21], 2048
    $region101: #{tpu_custom_call.1} parent=1 // pred_fallthru
      _
    // Predicated region
    $region102: #{tpu_custom_call.1} parent=1 // pred_check
      _
    $region103: #{tpu_custom_call.1} parent=1 // pred_check_branch
      %205 = sbr.rel (0) target = $region105
    $region104: #{tpu_custom_call.1} parent=1 // pred_region
      %206 = dma.done [#allocation21], 16
    $region105: #{tpu_custom_call.1} parent=1 // pred_fallthru
      _
    %v208 = vld [vmem:[#allocation2] sm:$0xf]
    %v209 = vld [vmem:[#allocation2 + $0x4] sm:$0xf]
    %v210 = vld [vmem:[#allocation5] sm:$0xff]
    %v211 = vld [vmem:[#allocation7] sm:$0x3]
    %v213 = vlaneseq
    %v214 = vshrl.u32 %v213, 7
    %v215 = vsub.s32 0, %v214
    %v216 = vrot.slane %v211, %v215
    %v217 = vlaneseq
    %v218 = vshrl.u32 %v217, 7
    %v219 = vsub.s32 1, %v218
    %v220 = vrot.slane %v211, %v219
    %v225 = vunpack.c.l.b16 %v208
    %v226 = vunpack.c.l.b16 %v209
    %v227 = vpack.c.b16 %v226, %v225
    %v229 = vunpack.c.l.b16 %v210
    %v230 = vunpack.c.h.b16 %v210
    %v231 = vpack.c.b16 %v229, %v229
    %v232 = vpack.c.b16 %v230, %v230
    %vm233 = vcmask 64512
    %v235 = vsel %vm233, %v227, 0
    %vm237 = vcmask 1043456
    %v239 = vsel %vm237, %v231, 0
    %v242 = vsel %vm237, %v232, 0
    %244 = vmatprep.subr.bf16.mxu0 %v242
    %245 = vmatpush1.bf16.msra.mxu0 %v239
    %246 = vmatprep.subr.bf16.mxu0 0
    %247 = vmatpush1.bf16.msra.mxu0 0
    %248 = vmatprep.subr.bf16.mxu0 0
    %249 = vmatpush1.bf16.msra.mxu0 0
    %250 = vmatprep.subr.bf16.mxu0 0
    %251 = vmatpush1.bf16.msra.mxu0 0
    %252 = vmatprep.subr.bf16.mxu0 0
    %253 = vmatpush1.bf16.msra.mxu0 0
    %254 = vmatprep.subr.bf16.mxu0 0
    %255 = vmatpush1.bf16.msra.mxu0 0
    %256 = vmatprep.subr.bf16.mxu0 0
    %257 = vmatpush1.bf16.msra.mxu0 0
    %258 = vmatprep.subr.bf16.mxu0 0
    %259 = vmatpush1.bf16.msra.mxu0 0
    %260 = vmatprep.subr.bf16.mxu0 0
    %261 = vmatpush1.bf16.msra.mxu0 0
    %262 = vmatprep.subr.bf16.mxu0 0
    %263 = vmatpush1.bf16.msra.mxu0 0
    %264 = vmatprep.subr.bf16.mxu0 0
    %265 = vmatpush1.bf16.msra.mxu0 0
    %266 = vmatprep.subr.bf16.mxu0 0
    %267 = vmatpush1.bf16.msra.mxu0 0
    %268 = vmatprep.subr.bf16.mxu0 0
    %269 = vmatpush1.bf16.msra.mxu0 0
    %270 = vmatprep.subr.bf16.mxu0 0
    %271 = vmatpush1.bf16.msra.mxu0 0
    %272 = vmatprep.subr.bf16.mxu0 0
    %273 = vmatpush1.bf16.msra.mxu0 0
    %274 = vmatprep.subr.bf16.mxu0 0
    %275 = vmatpush1.bf16.msra.mxu0 0
    %276 = vmatprep.mubr.bf16.mxu0 0
    %277 = vmatmul.mubr.bf16.gmra.mrb[0].mxu0 %v235
    %v278 = vpop.f32.mrb[0].mxu0
    %v279 = vadd.f32 %v216, %v278
    %v280 = vpop.f32.mrb[0].mxu0
    %v281 = vadd.f32 %v220, %v280
    %v282 = vpop.f32.mrb[0].mxu0
    %v283 = vadd.f32 %v216, %v282
    %v284 = vpop.f32.mrb[0].mxu0
    %v285 = vadd.f32 %v220, %v284
    %286 = vdwg.mxu0
    %v287 = vmax.f32 %v279, 0.0
    %v288 = vmax.f32 %v281, 0.0
    %v289 = vmax.f32 %v283, 0.0
    %v290 = vmax.f32 %v285, 0.0
    %v291 = vpack.c.bf16 %v289, %v287
    %v292 = vpack.c.bf16 %v290, %v288
    %v293 = vld [vmem:[#allocation8] sm:$0xff]
    %v294 = vld [vmem:[#allocation8 + $0x8] sm:$0xff]
    %v295 = vld [vmem:[#allocation8 + $0x10] sm:$0xff]
    %v296 = vld [vmem:[#allocation8 + $0x18] sm:$0xff]
    %v297 = vld [vmem:[#allocation8 + $0x20] sm:$0xff]
    %v298 = vld [vmem:[#allocation8 + $0x28] sm:$0xff]
    %v299 = vld [vmem:[#allocation8 + $0x30] sm:$0xff]
    %v300 = vld [vmem:[#allocation8 + $0x38] sm:$0xff]
    %v301 = vld [vmem:[#allocation8 + $0x40] sm:$0xff]
    %v302 = vld [vmem:[#allocation8 + $0x48] sm:$0xff]
    %v303 = vld [vmem:[#allocation8 + $0x50] sm:$0xff]
    %v304 = vld [vmem:[#allocation8 + $0x58] sm:$0xff]
    %v305 = vld [vmem:[#allocation8 + $0x60] sm:$0xff]
    %v306 = vld [vmem:[#allocation8 + $0x68] sm:$0xff]
    %v307 = vld [vmem:[#allocation8 + $0x70] sm:$0xff]
    %v308 = vld [vmem:[#allocation8 + $0x78] sm:$0xff]
    %v309 = vld [vmem:[#allocation8 + $0x80] sm:$0xff]
    %v310 = vld [vmem:[#allocation8 + $0x88] sm:$0xff]
    %v311 = vld [vmem:[#allocation8 + $0x90] sm:$0xff]
    %v312 = vld [vmem:[#allocation8 + $0x98] sm:$0xff]
    %v313 = vld [vmem:[#allocation8 + $0xa0] sm:$0xff]
    %v314 = vld [vmem:[#allocation8 + $0xa8] sm:$0xff]
    %v315 = vld [vmem:[#allocation8 + $0xb0] sm:$0xff]
    %v316 = vld [vmem:[#allocation8 + $0xb8] sm:$0xff]
    %v317 = vld [vmem:[#allocation8 + $0xc0] sm:$0xff]
    %v318 = vld [vmem:[#allocation8 + $0xc8] sm:$0xff]
    %v319 = vld [vmem:[#allocation8 + $0xd0] sm:$0xff]
    %v320 = vld [vmem:[#allocation8 + $0xd8] sm:$0xff]
    %v321 = vld [vmem:[#allocation8 + $0xe0] sm:$0xff]
    %v322 = vld [vmem:[#allocation8 + $0xe8] sm:$0xff]
    %v323 = vld [vmem:[#allocation8 + $0xf0] sm:$0xff]
    %v324 = vld [vmem:[#allocation8 + $0xf8] sm:$0xff]
    %v325 = vld [vmem:[#allocation10] sm:$0x3]
    %v327 = vlaneseq
    %v328 = vshrl.u32 %v327, 7
    %v329 = vsub.s32 0, %v328
    %v330 = vrot.slane %v325, %v329
    %v331 = vlaneseq
    %v332 = vshrl.u32 %v331, 7
    %v333 = vsub.s32 1, %v332
    %v334 = vrot.slane %v325, %v333
    %v369 = vunpack.c.l.b16 %v293
    %v370 = vunpack.c.h.b16 %v293
    %v371 = vunpack.c.l.b16 %v294
    %v372 = vunpack.c.h.b16 %v294
    %v373 = vunpack.c.l.b16 %v295
    %v374 = vunpack.c.h.b16 %v295
    %v375 = vunpack.c.l.b16 %v296
    %v376 = vunpack.c.h.b16 %v296
    %v377 = vunpack.c.l.b16 %v297
    %v378 = vunpack.c.h.b16 %v297
    %v379 = vunpack.c.l.b16 %v298
    %v380 = vunpack.c.h.b16 %v298
    %v381 = vunpack.c.l.b16 %v299
    %v382 = vunpack.c.h.b16 %v299
    %v383 = vunpack.c.l.b16 %v300
    %v384 = vunpack.c.h.b16 %v300
    %v385 = vunpack.c.l.b16 %v301
    %v386 = vunpack.c.h.b16 %v301
    %v387 = vunpack.c.l.b16 %v302
    %v388 = vunpack.c.h.b16 %v302
    %v389 = vunpack.c.l.b16 %v303
    %v390 = vunpack.c.h.b16 %v303
    %v391 = vunpack.c.l.b16 %v304
    %v392 = vunpack.c.h.b16 %v304
    %v393 = vunpack.c.l.b16 %v305
    %v394 = vunpack.c.h.b16 %v305
    %v395 = vunpack.c.l.b16 %v306
    %v396 = vunpack.c.h.b16 %v306
    %v397 = vunpack.c.l.b16 %v307
    %v398 = vunpack.c.h.b16 %v307
    %v399 = vunpack.c.l.b16 %v308
    %v400 = vunpack.c.h.b16 %v308
    %v401 = vunpack.c.l.b16 %v309
    %v402 = vunpack.c.h.b16 %v309
    %v403 = vunpack.c.l.b16 %v310
    %v404 = vunpack.c.h.b16 %v310
    %v405 = vunpack.c.l.b16 %v311
    %v406 = vunpack.c.h.b16 %v311
    %v407 = vunpack.c.l.b16 %v312
    %v408 = vunpack.c.h.b16 %v312
    %v409 = vunpack.c.l.b16 %v313
    %v410 = vunpack.c.h.b16 %v313
    %v411 = vunpack.c.l.b16 %v314
    %v412 = vunpack.c.h.b16 %v314
    %v413 = vunpack.c.l.b16 %v315
    %v414 = vunpack.c.h.b16 %v315
    %v415 = vunpack.c.l.b16 %v316
    %v416 = vunpack.c.h.b16 %v316
    %v417 = vunpack.c.l.b16 %v317
    %v418 = vunpack.c.h.b16 %v317
    %v419 = vunpack.c.l.b16 %v318
    %v420 = vunpack.c.h.b16 %v318
    %v421 = vunpack.c.l.b16 %v319
    %v422 = vunpack.c.h.b16 %v319
    %v423 = vunpack.c.l.b16 %v320
    %v424 = vunpack.c.h.b16 %v320
    %v425 = vunpack.c.l.b16 %v321
    %v426 = vunpack.c.h.b16 %v321
    %v427 = vunpack.c.l.b16 %v322
    %v428 = vunpack.c.h.b16 %v322
    %v429 = vunpack.c.l.b16 %v323
    %v430 = vunpack.c.h.b16 %v323
    %v431 = vunpack.c.l.b16 %v324
    %v432 = vunpack.c.h.b16 %v324
    %v433 = vpack.c.b16 %v371, %v369
    %v434 = vpack.c.b16 %v372, %v370
    %v435 = vpack.c.b16 %v375, %v373
    %v436 = vpack.c.b16 %v376, %v374
    %v437 = vpack.c.b16 %v379, %v377
    %v438 = vpack.c.b16 %v380, %v378
    %v439 = vpack.c.b16 %v383, %v381
    %v440 = vpack.c.b16 %v384, %v382
    %v441 = vpack.c.b16 %v387, %v385
    %v442 = vpack.c.b16 %v388, %v386
    %v443 = vpack.c.b16 %v391, %v389
    %v444 = vpack.c.b16 %v392, %v390
    %v445 = vpack.c.b16 %v395, %v393
    %v446 = vpack.c.b16 %v396, %v394
    %v447 = vpack.c.b16 %v399, %v397
    %v448 = vpack.c.b16 %v400, %v398
    %v449 = vpack.c.b16 %v403, %v401
    %v450 = vpack.c.b16 %v404, %v402
    %v451 = vpack.c.b16 %v407, %v405
    %v452 = vpack.c.b16 %v408, %v406
    %v453 = vpack.c.b16 %v411, %v409
    %v454 = vpack.c.b16 %v412, %v410
    %v455 = vpack.c.b16 %v415, %v413
    %v456 = vpack.c.b16 %v416, %v414
    %v457 = vpack.c.b16 %v419, %v417
    %v458 = vpack.c.b16 %v420, %v418
    %v459 = vpack.c.b16 %v423, %v421
    %v460 = vpack.c.b16 %v424, %v422
    %v461 = vpack.c.b16 %v427, %v425
    %v462 = vpack.c.b16 %v428, %v426
    %v463 = vpack.c.b16 %v431, %v429
    %v464 = vpack.c.b16 %v432, %v430
    %497 = vmatprep.subr.bf16.mxu0 %v434
    %498 = vmatpush1.bf16.msra.mxu0 %v433
    %499 = vmatprep.subr.bf16.mxu0 %v436
    %500 = vmatpush1.bf16.msra.mxu0 %v435
    %501 = vmatprep.subr.bf16.mxu0 %v438
    %502 = vmatpush1.bf16.msra.mxu0 %v437
    %503 = vmatprep.subr.bf16.mxu0 %v440
    %504 = vmatpush1.bf16.msra.mxu0 %v439
    %505 = vmatprep.subr.bf16.mxu0 %v442
    %506 = vmatpush1.bf16.msra.mxu0 %v441
    %507 = vmatprep.subr.bf16.mxu0 %v444
    %508 = vmatpush1.bf16.msra.mxu0 %v443
    %509 = vmatprep.subr.bf16.mxu0 %v446
    %510 = vmatpush1.bf16.msra.mxu0 %v445
    %511 = vmatprep.subr.bf16.mxu0 %v448
    %512 = vmatpush1.bf16.msra.mxu0 %v447
    %513 = vmatprep.subr.bf16.mxu0 %v450
    %514 = vmatpush1.bf16.msra.mxu0 %v449
    %515 = vmatprep.subr.bf16.mxu0 %v452
    %516 = vmatpush1.bf16.msra.mxu0 %v451
    %517 = vmatprep.subr.bf16.mxu0 %v454
    %518 = vmatpush1.bf16.msra.mxu0 %v453
    %519 = vmatprep.subr.bf16.mxu0 %v456
    %520 = vmatpush1.bf16.msra.mxu0 %v455
    %521 = vmatprep.subr.bf16.mxu0 %v458
    %522 = vmatpush1.bf16.msra.mxu0 %v457
    %523 = vmatprep.subr.bf16.mxu0 %v460
    %524 = vmatpush1.bf16.msra.mxu0 %v459
    %525 = vmatprep.subr.bf16.mxu0 %v462
    %526 = vmatpush1.bf16.msra.mxu0 %v461
    %527 = vmatprep.subr.bf16.mxu0 %v464
    %528 = vmatpush1.bf16.msra.mxu0 %v463
    %529 = vmatprep.mubr.bf16.mxu0 %v292
    %530 = vmatmul.mubr.bf16.gmra.mrb[0].mxu0 %v291
    %v531 = vpop.f32.mrb[0].mxu0
    %v532 = vadd.f32 %v330, %v531
    %v533 = vpop.f32.mrb[0].mxu0
    %v534 = vadd.f32 %v334, %v533
    %v535 = vpop.f32.mrb[0].mxu0
    %v536 = vadd.f32 %v330, %v535
    %v537 = vpop.f32.mrb[0].mxu0
    %v538 = vadd.f32 %v334, %v537
    %539 = vdwg.mxu0
    %v540 = vmax.f32 %v532, 0.0
    %v541 = vmax.f32 %v534, 0.0
    %v542 = vmax.f32 %v536, 0.0
    %v543 = vmax.f32 %v538, 0.0
    %v544 = vpack.c.bf16 %v542, %v540
    %v545 = vpack.c.bf16 %v543, %v541
    %v546 = vld [vmem:[#allocation11] sm:$0xff]
    %v547 = vld [vmem:[#allocation11 + $0x8] sm:$0xff]
    %v548 = vld [vmem:[#allocation11 + $0x10] sm:$0xff]
    %v549 = vld [vmem:[#allocation11 + $0x18] sm:$0xff]
    %v550 = vld [vmem:[#allocation11 + $0x20] sm:$0xff]
    %v551 = vld [vmem:[#allocation11 + $0x28] sm:$0xff]
    %v552 = vld [vmem:[#allocation11 + $0x30] sm:$0xff]
    %v553 = vld [vmem:[#allocation11 + $0x38] sm:$0xff]
    %v554 = vld [vmem:[#allocation11 + $0x40] sm:$0xff]
    %v555 = vld [vmem:[#allocation11 + $0x48] sm:$0xff]
    %v556 = vld [vmem:[#allocation11 + $0x50] sm:$0xff]
    %v557 = vld [vmem:[#allocation11 + $0x58] sm:$0xff]
    %v558 = vld [vmem:[#allocation11 + $0x60] sm:$0xff]
    %v559 = vld [vmem:[#allocation11 + $0x68] sm:$0xff]
    %v560 = vld [vmem:[#allocation11 + $0x70] sm:$0xff]
    %v561 = vld [vmem:[#allocation11 + $0x78] sm:$0xff]
    %v562 = vld [vmem:[#allocation11 + $0x80] sm:$0xff]
    %v563 = vld [vmem:[#allocation11 + $0x88] sm:$0xff]
    %v564 = vld [vmem:[#allocation11 + $0x90] sm:$0xff]
    %v565 = vld [vmem:[#allocation11 + $0x98] sm:$0xff]
    %v566 = vld [vmem:[#allocation11 + $0xa0] sm:$0xff]
    %v567 = vld [vmem:[#allocation11 + $0xa8] sm:$0xff]
    %v568 = vld [vmem:[#allocation11 + $0xb0] sm:$0xff]
    %v569 = vld [vmem:[#allocation11 + $0xb8] sm:$0xff]
    %v570 = vld [vmem:[#allocation11 + $0xc0] sm:$0xff]
    %v571 = vld [vmem:[#allocation11 + $0xc8] sm:$0xff]
    %v572 = vld [vmem:[#allocation11 + $0xd0] sm:$0xff]
    %v573 = vld [vmem:[#allocation11 + $0xd8] sm:$0xff]
    %v574 = vld [vmem:[#allocation11 + $0xe0] sm:$0xff]
    %v575 = vld [vmem:[#allocation11 + $0xe8] sm:$0xff]
    %v576 = vld [vmem:[#allocation11 + $0xf0] sm:$0xff]
    %v577 = vld [vmem:[#allocation11 + $0xf8] sm:$0xff]
    %v578 = vld [vmem:[#allocation13] sm:$0x3]
    %v580 = vlaneseq
    %v581 = vshrl.u32 %v580, 7
    %v582 = vsub.s32 0, %v581
    %v583 = vrot.slane %v578, %v582
    %v584 = vlaneseq
    %v585 = vshrl.u32 %v584, 7
    %v586 = vsub.s32 1, %v585
    %v587 = vrot.slane %v578, %v586
    %v622 = vunpack.c.l.b16 %v546
    %v623 = vunpack.c.h.b16 %v546
    %v624 = vunpack.c.l.b16 %v547
    %v625 = vunpack.c.h.b16 %v547
    %v626 = vunpack.c.l.b16 %v548
    %v627 = vunpack.c.h.b16 %v548
    %v628 = vunpack.c.l.b16 %v549
    %v629 = vunpack.c.h.b16 %v549
    %v630 = vunpack.c.l.b16 %v550
    %v631 = vunpack.c.h.b16 %v550
    %v632 = vunpack.c.l.b16 %v551
    %v633 = vunpack.c.h.b16 %v551
    %v634 = vunpack.c.l.b16 %v552
    %v635 = vunpack.c.h.b16 %v552
    %v636 = vunpack.c.l.b16 %v553
    %v637 = vunpack.c.h.b16 %v553
    %v638 = vunpack.c.l.b16 %v554
    %v639 = vunpack.c.h.b16 %v554
    %v640 = vunpack.c.l.b16 %v555
    %v641 = vunpack.c.h.b16 %v555
    %v642 = vunpack.c.l.b16 %v556
    %v643 = vunpack.c.h.b16 %v556
    %v644 = vunpack.c.l.b16 %v557
    %v645 = vunpack.c.h.b16 %v557
    %v646 = vunpack.c.l.b16 %v558
    %v647 = vunpack.c.h.b16 %v558
    %v648 = vunpack.c.l.b16 %v559
    %v649 = vunpack.c.h.b16 %v559
    %v650 = vunpack.c.l.b16 %v560
    %v651 = vunpack.c.h.b16 %v560
    %v652 = vunpack.c.l.b16 %v561
    %v653 = vunpack.c.h.b16 %v561
    %v654 = vunpack.c.l.b16 %v562
    %v655 = vunpack.c.h.b16 %v562
    %v656 = vunpack.c.l.b16 %v563
    %v657 = vunpack.c.h.b16 %v563
    %v658 = vunpack.c.l.b16 %v564
    %v659 = vunpack.c.h.b16 %v564
    %v660 = vunpack.c.l.b16 %v565
    %v661 = vunpack.c.h.b16 %v565
    %v662 = vunpack.c.l.b16 %v566
    %v663 = vunpack.c.h.b16 %v566
    %v664 = vunpack.c.l.b16 %v567
    %v665 = vunpack.c.h.b16 %v567
    %v666 = vunpack.c.l.b16 %v568
    %v667 = vunpack.c.h.b16 %v568
    %v668 = vunpack.c.l.b16 %v569
    %v669 = vunpack.c.h.b16 %v569
    %v670 = vunpack.c.l.b16 %v570
    %v671 = vunpack.c.h.b16 %v570
    %v672 = vunpack.c.l.b16 %v571
    %v673 = vunpack.c.h.b16 %v571
    %v674 = vunpack.c.l.b16 %v572
    %v675 = vunpack.c.h.b16 %v572
    %v676 = vunpack.c.l.b16 %v573
    %v677 = vunpack.c.h.b16 %v573
    %v678 = vunpack.c.l.b16 %v574
    %v679 = vunpack.c.h.b16 %v574
    %v680 = vunpack.c.l.b16 %v575
    %v681 = vunpack.c.h.b16 %v575
    %v682 = vunpack.c.l.b16 %v576
    %v683 = vunpack.c.h.b16 %v576
    %v684 = vunpack.c.l.b16 %v577
    %v685 = vunpack.c.h.b16 %v577
    %v686 = vpack.c.b16 %v624, %v622
    %v687 = vpack.c.b16 %v625, %v623
    %v688 = vpack.c.b16 %v628, %v626
    %v689 = vpack.c.b16 %v629, %v627
    %v690 = vpack.c.b16 %v632, %v630
    %v691 = vpack.c.b16 %v633, %v631
    %v692 = vpack.c.b16 %v636, %v634
    %v693 = vpack.c.b16 %v637, %v635
    %v694 = vpack.c.b16 %v640, %v638
    %v695 = vpack.c.b16 %v641, %v639
    %v696 = vpack.c.b16 %v644, %v642
    %v697 = vpack.c.b16 %v645, %v643
    %v698 = vpack.c.b16 %v648, %v646
    %v699 = vpack.c.b16 %v649, %v647
    %v700 = vpack.c.b16 %v652, %v650
    %v701 = vpack.c.b16 %v653, %v651
    %v702 = vpack.c.b16 %v656, %v654
    %v703 = vpack.c.b16 %v657, %v655
    %v704 = vpack.c.b16 %v660, %v658
    %v705 = vpack.c.b16 %v661, %v659
    %v706 = vpack.c.b16 %v664, %v662
    %v707 = vpack.c.b16 %v665, %v663
    %v708 = vpack.c.b16 %v668, %v666
    %v709 = vpack.c.b16 %v669, %v667
    %v710 = vpack.c.b16 %v672, %v670
    %v711 = vpack.c.b16 %v673, %v671
    %v712 = vpack.c.b16 %v676, %v674
    %v713 = vpack.c.b16 %v677, %v675
    %v714 = vpack.c.b16 %v680, %v678
    %v715 = vpack.c.b16 %v681, %v679
    %v716 = vpack.c.b16 %v684, %v682
    %v717 = vpack.c.b16 %v685, %v683
    %750 = vmatprep.subr.bf16.mxu0 %v687
    %751 = vmatpush1.bf16.msra.mxu0 %v686
    %752 = vmatprep.subr.bf16.mxu0 %v689
    %753 = vmatpush1.bf16.msra.mxu0 %v688
    %754 = vmatprep.subr.bf16.mxu0 %v691
    %755 = vmatpush1.bf16.msra.mxu0 %v690
    %756 = vmatprep.subr.bf16.mxu0 %v693
    %757 = vmatpush1.bf16.msra.mxu0 %v692
    %758 = vmatprep.subr.bf16.mxu0 %v695
    %759 = vmatpush1.bf16.msra.mxu0 %v694
    %760 = vmatprep.subr.bf16.mxu0 %v697
    %761 = vmatpush1.bf16.msra.mxu0 %v696
    %762 = vmatprep.subr.bf16.mxu0 %v699
    %763 = vmatpush1.bf16.msra.mxu0 %v698
    %764 = vmatprep.subr.bf16.mxu0 %v701
    %765 = vmatpush1.bf16.msra.mxu0 %v700
    %766 = vmatprep.subr.bf16.mxu0 %v703
    %767 = vmatpush1.bf16.msra.mxu0 %v702
    %768 = vmatprep.subr.bf16.mxu0 %v705
    %769 = vmatpush1.bf16.msra.mxu0 %v704
    %770 = vmatprep.subr.bf16.mxu0 %v707
    %771 = vmatpush1.bf16.msra.mxu0 %v706
    %772 = vmatprep.subr.bf16.mxu0 %v709
    %773 = vmatpush1.bf16.msra.mxu0 %v708
    %774 = vmatprep.subr.bf16.mxu0 %v711
    %775 = vmatpush1.bf16.msra.mxu0 %v710
    %776 = vmatprep.subr.bf16.mxu0 %v713
    %777 = vmatpush1.bf16.msra.mxu0 %v712
    %778 = vmatprep.subr.bf16.mxu0 %v715
    %779 = vmatpush1.bf16.msra.mxu0 %v714
    %780 = vmatprep.subr.bf16.mxu0 %v717
    %781 = vmatpush1.bf16.msra.mxu0 %v716
    %782 = vmatprep.mubr.bf16.mxu0 %v545
    %783 = vmatmul.mubr.bf16.gmra.mrb[0].mxu0 %v544
    %v784 = vpop.f32.mrb[0].mxu0
    %v785 = vadd.f32 %v583, %v784
    %v786 = vpop.f32.mrb[0].mxu0
    %v787 = vadd.f32 %v587, %v786
    %v788 = vpop.f32.mrb[0].mxu0
    %v789 = vadd.f32 %v583, %v788
    %v790 = vpop.f32.mrb[0].mxu0
    %v791 = vadd.f32 %v587, %v790
    %792 = vdwg.mxu0
    %v793 = vmax.f32 %v785, 0.0
    %v794 = vmax.f32 %v787, 0.0
    %v795 = vmax.f32 %v789, 0.0
    %v796 = vmax.f32 %v791, 0.0
    %v797 = vpack.c.bf16 %v795, %v793
    %v798 = vpack.c.bf16 %v796, %v794
    %v799 = vld [vmem:[#allocation14] sm:$0xff]
    %v800 = vld [vmem:[#allocation14 + $0x8] sm:$0xff]
    %v801 = vld [vmem:[#allocation14 + $0x10] sm:$0xff]
    %v802 = vld [vmem:[#allocation14 + $0x18] sm:$0xff]
    %v803 = vld [vmem:[#allocation14 + $0x20] sm:$0xff]
    %v804 = vld [vmem:[#allocation14 + $0x28] sm:$0xff]
    %v805 = vld [vmem:[#allocation14 + $0x30] sm:$0xff]
    %v806 = vld [vmem:[#allocation14 + $0x38] sm:$0xff]
    %v807 = vld [vmem:[#allocation14 + $0x40] sm:$0xff]
    %v808 = vld [vmem:[#allocation14 + $0x48] sm:$0xff]
    %v809 = vld [vmem:[#allocation14 + $0x50] sm:$0xff]
    %v810 = vld [vmem:[#allocation14 + $0x58] sm:$0xff]
    %v811 = vld [vmem:[#allocation14 + $0x60] sm:$0xff]
    %v812 = vld [vmem:[#allocation14 + $0x68] sm:$0xff]
    %v813 = vld [vmem:[#allocation14 + $0x70] sm:$0xff]
    %v814 = vld [vmem:[#allocation14 + $0x78] sm:$0xff]
    %v815 = vld [vmem:[#allocation14 + $0x80] sm:$0xff]
    %v816 = vld [vmem:[#allocation14 + $0x88] sm:$0xff]
    %v817 = vld [vmem:[#allocation14 + $0x90] sm:$0xff]
    %v818 = vld [vmem:[#allocation14 + $0x98] sm:$0xff]
    %v819 = vld [vmem:[#allocation14 + $0xa0] sm:$0xff]
    %v820 = vld [vmem:[#allocation14 + $0xa8] sm:$0xff]
    %v821 = vld [vmem:[#allocation14 + $0xb0] sm:$0xff]
    %v822 = vld [vmem:[#allocation14 + $0xb8] sm:$0xff]
    %v823 = vld [vmem:[#allocation14 + $0xc0] sm:$0xff]
    %v824 = vld [vmem:[#allocation14 + $0xc8] sm:$0xff]
    %v825 = vld [vmem:[#allocation14 + $0xd0] sm:$0xff]
    %v826 = vld [vmem:[#allocation14 + $0xd8] sm:$0xff]
    %v827 = vld [vmem:[#allocation14 + $0xe0] sm:$0xff]
    %v828 = vld [vmem:[#allocation14 + $0xe8] sm:$0xff]
    %v829 = vld [vmem:[#allocation14 + $0xf0] sm:$0xff]
    %v830 = vld [vmem:[#allocation14 + $0xf8] sm:$0xff]
    %v831 = vld [vmem:[#allocation16] sm:$0x3]
    %v833 = vlaneseq
    %v834 = vshrl.u32 %v833, 7
    %v835 = vsub.s32 0, %v834
    %v836 = vrot.slane %v831, %v835
    %v837 = vlaneseq
    %v838 = vshrl.u32 %v837, 7
    %v839 = vsub.s32 1, %v838
    %v840 = vrot.slane %v831, %v839
    %v875 = vunpack.c.l.b16 %v799
    %v876 = vunpack.c.h.b16 %v799
    %v877 = vunpack.c.l.b16 %v800
    %v878 = vunpack.c.h.b16 %v800
    %v879 = vunpack.c.l.b16 %v801
    %v880 = vunpack.c.h.b16 %v801
    %v881 = vunpack.c.l.b16 %v802
    %v882 = vunpack.c.h.b16 %v802
    %v883 = vunpack.c.l.b16 %v803
    %v884 = vunpack.c.h.b16 %v803
    %v885 = vunpack.c.l.b16 %v804
    %v886 = vunpack.c.h.b16 %v804
    %v887 = vunpack.c.l.b16 %v805
    %v888 = vunpack.c.h.b16 %v805
    %v889 = vunpack.c.l.b16 %v806
    %v890 = vunpack.c.h.b16 %v806
    %v891 = vunpack.c.l.b16 %v807
    %v892 = vunpack.c.h.b16 %v807
    %v893 = vunpack.c.l.b16 %v808
    %v894 = vunpack.c.h.b16 %v808
    %v895 = vunpack.c.l.b16 %v809
    %v896 = vunpack.c.h.b16 %v809
    %v897 = vunpack.c.l.b16 %v810
    %v898 = vunpack.c.h.b16 %v810
    %v899 = vunpack.c.l.b16 %v811
    %v900 = vunpack.c.h.b16 %v811
    %v901 = vunpack.c.l.b16 %v812
    %v902 = vunpack.c.h.b16 %v812
    %v903 = vunpack.c.l.b16 %v813
    %v904 = vunpack.c.h.b16 %v813
    %v905 = vunpack.c.l.b16 %v814
    %v906 = vunpack.c.h.b16 %v814
    %v907 = vunpack.c.l.b16 %v815
    %v908 = vunpack.c.h.b16 %v815
    %v909 = vunpack.c.l.b16 %v816
    %v910 = vunpack.c.h.b16 %v816
    %v911 = vunpack.c.l.b16 %v817
    %v912 = vunpack.c.h.b16 %v817
    %v913 = vunpack.c.l.b16 %v818
    %v914 = vunpack.c.h.b16 %v818
    %v915 = vunpack.c.l.b16 %v819
    %v916 = vunpack.c.h.b16 %v819
    %v917 = vunpack.c.l.b16 %v820
    %v918 = vunpack.c.h.b16 %v820
    %v919 = vunpack.c.l.b16 %v821
    %v920 = vunpack.c.h.b16 %v821
    %v921 = vunpack.c.l.b16 %v822
    %v922 = vunpack.c.h.b16 %v822
    %v923 = vunpack.c.l.b16 %v823
    %v924 = vunpack.c.h.b16 %v823
    %v925 = vunpack.c.l.b16 %v824
    %v926 = vunpack.c.h.b16 %v824
    %v927 = vunpack.c.l.b16 %v825
    %v928 = vunpack.c.h.b16 %v825
    %v929 = vunpack.c.l.b16 %v826
    %v930 = vunpack.c.h.b16 %v826
    %v931 = vunpack.c.l.b16 %v827
    %v932 = vunpack.c.h.b16 %v827
    %v933 = vunpack.c.l.b16 %v828
    %v934 = vunpack.c.h.b16 %v828
    %v935 = vunpack.c.l.b16 %v829
    %v936 = vunpack.c.h.b16 %v829
    %v937 = vunpack.c.l.b16 %v830
    %v938 = vunpack.c.h.b16 %v830
    %v939 = vpack.c.b16 %v877, %v875
    %v940 = vpack.c.b16 %v878, %v876
    %v941 = vpack.c.b16 %v881, %v879
    %v942 = vpack.c.b16 %v882, %v880
    %v943 = vpack.c.b16 %v885, %v883
    %v944 = vpack.c.b16 %v886, %v884
    %v945 = vpack.c.b16 %v889, %v887
    %v946 = vpack.c.b16 %v890, %v888
    %v947 = vpack.c.b16 %v893, %v891
    %v948 = vpack.c.b16 %v894, %v892
    %v949 = vpack.c.b16 %v897, %v895
    %v950 = vpack.c.b16 %v898, %v896
    %v951 = vpack.c.b16 %v901, %v899
    %v952 = vpack.c.b16 %v902, %v900
    %v953 = vpack.c.b16 %v905, %v903
    %v954 = vpack.c.b16 %v906, %v904
    %v955 = vpack.c.b16 %v909, %v907
    %v956 = vpack.c.b16 %v910, %v908
    %v957 = vpack.c.b16 %v913, %v911
    %v958 = vpack.c.b16 %v914, %v912
    %v959 = vpack.c.b16 %v917, %v915
    %v960 = vpack.c.b16 %v918, %v916
    %v961 = vpack.c.b16 %v921, %v919
    %v962 = vpack.c.b16 %v922, %v920
    %v963 = vpack.c.b16 %v925, %v923
    %v964 = vpack.c.b16 %v926, %v924
    %v965 = vpack.c.b16 %v929, %v927
    %v966 = vpack.c.b16 %v930, %v928
    %v967 = vpack.c.b16 %v933, %v931
    %v968 = vpack.c.b16 %v934, %v932
    %v969 = vpack.c.b16 %v937, %v935
    %v970 = vpack.c.b16 %v938, %v936
    %1003 = vmatprep.subr.bf16.mxu0 %v940
    %1004 = vmatpush1.bf16.msra.mxu0 %v939
    %1005 = vmatprep.subr.bf16.mxu0 %v942
    %1006 = vmatpush1.bf16.msra.mxu0 %v941
    %1007 = vmatprep.subr.bf16.mxu0 %v944
    %1008 = vmatpush1.bf16.msra.mxu0 %v943
    %1009 = vmatprep.subr.bf16.mxu0 %v946
    %1010 = vmatpush1.bf16.msra.mxu0 %v945
    %1011 = vmatprep.subr.bf16.mxu0 %v948
    %1012 = vmatpush1.bf16.msra.mxu0 %v947
    %1013 = vmatprep.subr.bf16.mxu0 %v950
    %1014 = vmatpush1.bf16.msra.mxu0 %v949
    %1015 = vmatprep.subr.bf16.mxu0 %v952
    %1016 = vmatpush1.bf16.msra.mxu0 %v951
    %1017 = vmatprep.subr.bf16.mxu0 %v954
    %1018 = vmatpush1.bf16.msra.mxu0 %v953
    %1019 = vmatprep.subr.bf16.mxu0 %v956
    %1020 = vmatpush1.bf16.msra.mxu0 %v955
    %1021 = vmatprep.subr.bf16.mxu0 %v958
    %1022 = vmatpush1.bf16.msra.mxu0 %v957
    %1023 = vmatprep.subr.bf16.mxu0 %v960
    %1024 = vmatpush1.bf16.msra.mxu0 %v959
    %1025 = vmatprep.subr.bf16.mxu0 %v962
    %1026 = vmatpush1.bf16.msra.mxu0 %v961
    %1027 = vmatprep.subr.bf16.mxu0 %v964
    %1028 = vmatpush1.bf16.msra.mxu0 %v963
    %1029 = vmatprep.subr.bf16.mxu0 %v966
    %1030 = vmatpush1.bf16.msra.mxu0 %v965
    %1031 = vmatprep.subr.bf16.mxu0 %v968
    %1032 = vmatpush1.bf16.msra.mxu0 %v967
    %1033 = vmatprep.subr.bf16.mxu0 %v970
    %1034 = vmatpush1.bf16.msra.mxu0 %v969
    %1035 = vmatprep.mubr.bf16.mxu0 %v798
    %1036 = vmatmul.mubr.bf16.gmra.mrb[0].mxu0 %v797
    %v1037 = vpop.f32.mrb[0].mxu0
    %v1038 = vadd.f32 %v836, %v1037
    %v1039 = vpop.f32.mrb[0].mxu0
    %v1040 = vadd.f32 %v840, %v1039
    %v1041 = vpop.f32.mrb[0].mxu0
    %v1042 = vadd.f32 %v836, %v1041
    %v1043 = vpop.f32.mrb[0].mxu0
    %v1044 = vadd.f32 %v840, %v1043
    %1045 = vdwg.mxu0
    %v1046 = vmax.f32 %v1038, 0.0
    %v1047 = vmax.f32 %v1040, 0.0
    %v1048 = vmax.f32 %v1042, 0.0
    %v1049 = vmax.f32 %v1044, 0.0
    %v1050 = vpack.c.bf16 %v1048, %v1046
    %v1051 = vpack.c.bf16 %v1049, %v1047
    %v1052 = vld [vmem:[#allocation17] sm:$0xff]
    %v1053 = vld [vmem:[#allocation17 + $0x8] sm:$0xff]
    %v1054 = vld [vmem:[#allocation17 + $0x10] sm:$0xff]
    %v1055 = vld [vmem:[#allocation17 + $0x18] sm:$0xff]
    %v1056 = vld [vmem:[#allocation17 + $0x20] sm:$0xff]
    %v1057 = vld [vmem:[#allocation17 + $0x28] sm:$0xff]
    %v1058 = vld [vmem:[#allocation17 + $0x30] sm:$0xff]
    %v1059 = vld [vmem:[#allocation17 + $0x38] sm:$0xff]
    %v1060 = vld [vmem:[#allocation17 + $0x40] sm:$0xff]
    %v1061 = vld [vmem:[#allocation17 + $0x48] sm:$0xff]
    %v1062 = vld [vmem:[#allocation17 + $0x50] sm:$0xff]
    %v1063 = vld [vmem:[#allocation17 + $0x58] sm:$0xff]
    %v1064 = vld [vmem:[#allocation17 + $0x60] sm:$0xff]
    %v1065 = vld [vmem:[#allocation17 + $0x68] sm:$0xff]
    %v1066 = vld [vmem:[#allocation17 + $0x70] sm:$0xff]
    %v1067 = vld [vmem:[#allocation17 + $0x78] sm:$0xff]
    %v1068 = vld [vmem:[#allocation17 + $0x80] sm:$0xff]
    %v1069 = vld [vmem:[#allocation17 + $0x88] sm:$0xff]
    %v1070 = vld [vmem:[#allocation17 + $0x90] sm:$0xff]
    %v1071 = vld [vmem:[#allocation17 + $0x98] sm:$0xff]
    %v1072 = vld [vmem:[#allocation17 + $0xa0] sm:$0xff]
    %v1073 = vld [vmem:[#allocation17 + $0xa8] sm:$0xff]
    %v1074 = vld [vmem:[#allocation17 + $0xb0] sm:$0xff]
    %v1075 = vld [vmem:[#allocation17 + $0xb8] sm:$0xff]
    %v1076 = vld [vmem:[#allocation17 + $0xc0] sm:$0xff]
    %v1077 = vld [vmem:[#allocation17 + $0xc8] sm:$0xff]
    %v1078 = vld [vmem:[#allocation17 + $0xd0] sm:$0xff]
    %v1079 = vld [vmem:[#allocation17 + $0xd8] sm:$0xff]
    %v1080 = vld [vmem:[#allocation17 + $0xe0] sm:$0xff]
    %v1081 = vld [vmem:[#allocation17 + $0xe8] sm:$0xff]
    %v1082 = vld [vmem:[#allocation17 + $0xf0] sm:$0xff]
    %v1083 = vld [vmem:[#allocation17 + $0xf8] sm:$0xff]
    %v1084 = vld [vmem:[#allocation19] sm:$0x3]
    %v1086 = vlaneseq
    %v1087 = vshrl.u32 %v1086, 7
    %v1088 = vsub.s32 0, %v1087
    %v1089 = vrot.slane %v1084, %v1088
    %v1090 = vlaneseq
    %v1091 = vshrl.u32 %v1090, 7
    %v1092 = vsub.s32 1, %v1091
    %v1093 = vrot.slane %v1084, %v1092
    %v1128 = vunpack.c.l.b16 %v1052
    %v1129 = vunpack.c.h.b16 %v1052
    %v1130 = vunpack.c.l.b16 %v1053
    %v1131 = vunpack.c.h.b16 %v1053
    %v1132 = vunpack.c.l.b16 %v1054
    %v1133 = vunpack.c.h.b16 %v1054
    %v1134 = vunpack.c.l.b16 %v1055
    %v1135 = vunpack.c.h.b16 %v1055
    %v1136 = vunpack.c.l.b16 %v1056
    %v1137 = vunpack.c.h.b16 %v1056
    %v1138 = vunpack.c.l.b16 %v1057
    %v1139 = vunpack.c.h.b16 %v1057
    %v1140 = vunpack.c.l.b16 %v1058
    %v1141 = vunpack.c.h.b16 %v1058
    %v1142 = vunpack.c.l.b16 %v1059
    %v1143 = vunpack.c.h.b16 %v1059
    %v1144 = vunpack.c.l.b16 %v1060
    %v1145 = vunpack.c.h.b16 %v1060
    %v1146 = vunpack.c.l.b16 %v1061
    %v1147 = vunpack.c.h.b16 %v1061
    %v1148 = vunpack.c.l.b16 %v1062
    %v1149 = vunpack.c.h.b16 %v1062
    %v1150 = vunpack.c.l.b16 %v1063
    %v1151 = vunpack.c.h.b16 %v1063
    %v1152 = vunpack.c.l.b16 %v1064
    %v1153 = vunpack.c.h.b16 %v1064
    %v1154 = vunpack.c.l.b16 %v1065
    %v1155 = vunpack.c.h.b16 %v1065
    %v1156 = vunpack.c.l.b16 %v1066
    %v1157 = vunpack.c.h.b16 %v1066
    %v1158 = vunpack.c.l.b16 %v1067
    %v1159 = vunpack.c.h.b16 %v1067
    %v1160 = vunpack.c.l.b16 %v1068
    %v1161 = vunpack.c.h.b16 %v1068
    %v1162 = vunpack.c.l.b16 %v1069
    %v1163 = vunpack.c.h.b16 %v1069
    %v1164 = vunpack.c.l.b16 %v1070
    %v1165 = vunpack.c.h.b16 %v1070
    %v1166 = vunpack.c.l.b16 %v1071
    %v1167 = vunpack.c.h.b16 %v1071
    %v1168 = vunpack.c.l.b16 %v1072
    %v1169 = vunpack.c.h.b16 %v1072
    %v1170 = vunpack.c.l.b16 %v1073
    %v1171 = vunpack.c.h.b16 %v1073
    %v1172 = vunpack.c.l.b16 %v1074
    %v1173 = vunpack.c.h.b16 %v1074
    %v1174 = vunpack.c.l.b16 %v1075
    %v1175 = vunpack.c.h.b16 %v1075
    %v1176 = vunpack.c.l.b16 %v1076
    %v1177 = vunpack.c.h.b16 %v1076
    %v1178 = vunpack.c.l.b16 %v1077
    %v1179 = vunpack.c.h.b16 %v1077
    %v1180 = vunpack.c.l.b16 %v1078
    %v1181 = vunpack.c.h.b16 %v1078
    %v1182 = vunpack.c.l.b16 %v1079
    %v1183 = vunpack.c.h.b16 %v1079
    %v1184 = vunpack.c.l.b16 %v1080
    %v1185 = vunpack.c.h.b16 %v1080
    %v1186 = vunpack.c.l.b16 %v1081
    %v1187 = vunpack.c.h.b16 %v1081
    %v1188 = vunpack.c.l.b16 %v1082
    %v1189 = vunpack.c.h.b16 %v1082
    %v1190 = vunpack.c.l.b16 %v1083
    %v1191 = vunpack.c.h.b16 %v1083
    %v1192 = vpack.c.b16 %v1130, %v1128
    %v1193 = vpack.c.b16 %v1131, %v1129
    %v1194 = vpack.c.b16 %v1134, %v1132
    %v1195 = vpack.c.b16 %v1135, %v1133
    %v1196 = vpack.c.b16 %v1138, %v1136
    %v1197 = vpack.c.b16 %v1139, %v1137
    %v1198 = vpack.c.b16 %v1142, %v1140
    %v1199 = vpack.c.b16 %v1143, %v1141
    %v1200 = vpack.c.b16 %v1146, %v1144
    %v1201 = vpack.c.b16 %v1147, %v1145
    %v1202 = vpack.c.b16 %v1150, %v1148
    %v1203 = vpack.c.b16 %v1151, %v1149
    %v1204 = vpack.c.b16 %v1154, %v1152
    %v1205 = vpack.c.b16 %v1155, %v1153
    %v1206 = vpack.c.b16 %v1158, %v1156
    %v1207 = vpack.c.b16 %v1159, %v1157
    %v1208 = vpack.c.b16 %v1162, %v1160
    %v1209 = vpack.c.b16 %v1163, %v1161
    %v1210 = vpack.c.b16 %v1166, %v1164
    %v1211 = vpack.c.b16 %v1167, %v1165
    %v1212 = vpack.c.b16 %v1170, %v1168
    %v1213 = vpack.c.b16 %v1171, %v1169
    %v1214 = vpack.c.b16 %v1174, %v1172
    %v1215 = vpack.c.b16 %v1175, %v1173
    %v1216 = vpack.c.b16 %v1178, %v1176
    %v1217 = vpack.c.b16 %v1179, %v1177
    %v1218 = vpack.c.b16 %v1182, %v1180
    %v1219 = vpack.c.b16 %v1183, %v1181
    %v1220 = vpack.c.b16 %v1186, %v1184
    %v1221 = vpack.c.b16 %v1187, %v1185
    %v1222 = vpack.c.b16 %v1190, %v1188
    %v1223 = vpack.c.b16 %v1191, %v1189
    %1256 = vmatprep.subr.bf16.mxu0 %v1193
    %1257 = vmatpush1.bf16.msra.mxu0 %v1192
    %1258 = vmatprep.subr.bf16.mxu0 %v1195
    %1259 = vmatpush1.bf16.msra.mxu0 %v1194
    %1260 = vmatprep.subr.bf16.mxu0 %v1197
    %1261 = vmatpush1.bf16.msra.mxu0 %v1196
    %1262 = vmatprep.subr.bf16.mxu0 %v1199
    %1263 = vmatpush1.bf16.msra.mxu0 %v1198
    %1264 = vmatprep.subr.bf16.mxu0 %v1201
    %1265 = vmatpush1.bf16.msra.mxu0 %v1200
    %1266 = vmatprep.subr.bf16.mxu0 %v1203
    %1267 = vmatpush1.bf16.msra.mxu0 %v1202
    %1268 = vmatprep.subr.bf16.mxu0 %v1205
    %1269 = vmatpush1.bf16.msra.mxu0 %v1204
    %1270 = vmatprep.subr.bf16.mxu0 %v1207
    %1271 = vmatpush1.bf16.msra.mxu0 %v1206
    %1272 = vmatprep.subr.bf16.mxu0 %v1209
    %1273 = vmatpush1.bf16.msra.mxu0 %v1208
    %1274 = vmatprep.subr.bf16.mxu0 %v1211
    %1275 = vmatpush1.bf16.msra.mxu0 %v1210
    %1276 = vmatprep.subr.bf16.mxu0 %v1213
    %1277 = vmatpush1.bf16.msra.mxu0 %v1212
    %1278 = vmatprep.subr.bf16.mxu0 %v1215
    %1279 = vmatpush1.bf16.msra.mxu0 %v1214
    %1280 = vmatprep.subr.bf16.mxu0 %v1217
    %1281 = vmatpush1.bf16.msra.mxu0 %v1216
    %1282 = vmatprep.subr.bf16.mxu0 %v1219
    %1283 = vmatpush1.bf16.msra.mxu0 %v1218
    %1284 = vmatprep.subr.bf16.mxu0 %v1221
    %1285 = vmatpush1.bf16.msra.mxu0 %v1220
    %1286 = vmatprep.subr.bf16.mxu0 %v1223
    %1287 = vmatpush1.bf16.msra.mxu0 %v1222
    %1288 = vmatprep.mubr.bf16.mxu0 %v1051
    %1289 = vmatmul.mubr.bf16.gmra.mrb[0].mxu0 %v1050
    %v1290 = vpop.f32.mrb[0].mxu0
    %v1291 = vadd.f32 %v1089, %v1290
    %v1292 = vpop.f32.mrb[0].mxu0
    %v1293 = vadd.f32 %v1093, %v1292
    %v1294 = vpop.f32.mrb[0].mxu0
    %v1295 = vadd.f32 %v1089, %v1294
    %v1296 = vpop.f32.mrb[0].mxu0
    %v1297 = vadd.f32 %v1093, %v1296
    %1298 = vdwg.mxu0
    %v1299 = vmax.f32 %v1291, 0.0
    %v1300 = vmax.f32 %v1293, 0.0
    %v1301 = vmax.f32 %v1295, 0.0
    %v1302 = vmax.f32 %v1297, 0.0
    %v1303 = vpack.c.bf16 %v1301, %v1299
    %v1304 = vpack.c.bf16 %v1302, %v1300
    %v1305 = vld [vmem:[#allocation20] sm:$0xf]
    %v1306 = vld [vmem:[#allocation20 + $0x4] sm:$0xf]
    %v1307 = vld [vmem:[#allocation20 + $0x8] sm:$0xf]
    %v1308 = vld [vmem:[#allocation20 + $0xc] sm:$0xf]
    %v1309 = vld [vmem:[#allocation20 + $0x10] sm:$0xf]
    %v1310 = vld [vmem:[#allocation20 + $0x14] sm:$0xf]
    %v1311 = vld [vmem:[#allocation20 + $0x18] sm:$0xf]
    %v1312 = vld [vmem:[#allocation20 + $0x1c] sm:$0xf]
    %v1313 = vld [vmem:[#allocation20 + $0x20] sm:$0xf]
    %v1314 = vld [vmem:[#allocation20 + $0x24] sm:$0xf]
    %v1315 = vld [vmem:[#allocation20 + $0x28] sm:$0xf]
    %v1316 = vld [vmem:[#allocation20 + $0x2c] sm:$0xf]
    %v1317 = vld [vmem:[#allocation20 + $0x30] sm:$0xf]
    %v1318 = vld [vmem:[#allocation20 + $0x34] sm:$0xf]
    %v1319 = vld [vmem:[#allocation20 + $0x38] sm:$0xf]
    %v1320 = vld [vmem:[#allocation20 + $0x3c] sm:$0xf]
    %v1321 = vld [vmem:[#allocation20 + $0x40] sm:$0xf]
    %v1322 = vld [vmem:[#allocation20 + $0x44] sm:$0xf]
    %v1323 = vld [vmem:[#allocation20 + $0x48] sm:$0xf]
    %v1324 = vld [vmem:[#allocation20 + $0x4c] sm:$0xf]
    %v1325 = vld [vmem:[#allocation20 + $0x50] sm:$0xf]
    %v1326 = vld [vmem:[#allocation20 + $0x54] sm:$0xf]
    %v1327 = vld [vmem:[#allocation20 + $0x58] sm:$0xf]
    %v1328 = vld [vmem:[#allocation20 + $0x5c] sm:$0xf]
    %v1329 = vld [vmem:[#allocation20 + $0x60] sm:$0xf]
    %v1330 = vld [vmem:[#allocation20 + $0x64] sm:$0xf]
    %v1331 = vld [vmem:[#allocation20 + $0x68] sm:$0xf]
    %v1332 = vld [vmem:[#allocation20 + $0x6c] sm:$0xf]
    %v1333 = vld [vmem:[#allocation20 + $0x70] sm:$0xf]
    %v1334 = vld [vmem:[#allocation20 + $0x74] sm:$0xf]
    %v1335 = vld [vmem:[#allocation20 + $0x78] sm:$0xf]
    %v1336 = vld [vmem:[#allocation20 + $0x7c] sm:$0xf]
    %v1337 = vld [vmem:[#allocation22] sm:$0x1]
    %v1339 = vlaneseq
    %v1340 = vshrl.u32 %v1339, 7
    %v1341 = vsub.s32 0, %v1340
    %v1342 = vrot.slane %v1337, %v1341
    %v1376 = vunpack.c.l.b16 %v1305
    %v1377 = vunpack.c.l.b16 %v1306
    %v1378 = vunpack.c.l.b16 %v1307
    %v1379 = vunpack.c.l.b16 %v1308
    %v1380 = vunpack.c.l.b16 %v1309
    %v1381 = vunpack.c.l.b16 %v1310
    %v1382 = vunpack.c.l.b16 %v1311
    %v1383 = vunpack.c.l.b16 %v1312
    %v1384 = vunpack.c.l.b16 %v1313
    %v1385 = vunpack.c.l.b16 %v1314
    %v1386 = vunpack.c.l.b16 %v1315
    %v1387 = vunpack.c.l.b16 %v1316
    %v1388 = vunpack.c.l.b16 %v1317
    %v1389 = vunpack.c.l.b16 %v1318
    %v1390 = vunpack.c.l.b16 %v1319
    %v1391 = vunpack.c.l.b16 %v1320
    %v1392 = vunpack.c.l.b16 %v1321
    %v1393 = vunpack.c.l.b16 %v1322
    %v1394 = vunpack.c.l.b16 %v1323
    %v1395 = vunpack.c.l.b16 %v1324
    %v1396 = vunpack.c.l.b16 %v1325
    %v1397 = vunpack.c.l.b16 %v1326
    %v1398 = vunpack.c.l.b16 %v1327
    %v1399 = vunpack.c.l.b16 %v1328
    %v1400 = vunpack.c.l.b16 %v1329
    %v1401 = vunpack.c.l.b16 %v1330
    %v1402 = vunpack.c.l.b16 %v1331
    %v1403 = vunpack.c.l.b16 %v1332
    %v1404 = vunpack.c.l.b16 %v1333
    %v1405 = vunpack.c.l.b16 %v1334
    %v1406 = vunpack.c.l.b16 %v1335
    %v1407 = vunpack.c.l.b16 %v1336
    %v1408 = vpack.c.b16 %v1377, %v1376
    %v1409 = vpack.c.b16 %v1379, %v1378
    %v1410 = vpack.c.b16 %v1381, %v1380
    %v1411 = vpack.c.b16 %v1383, %v1382
    %v1412 = vpack.c.b16 %v1385, %v1384
    %v1413 = vpack.c.b16 %v1387, %v1386
    %v1414 = vpack.c.b16 %v1389, %v1388
    %v1415 = vpack.c.b16 %v1391, %v1390
    %v1416 = vpack.c.b16 %v1393, %v1392
    %v1417 = vpack.c.b16 %v1395, %v1394
    %v1418 = vpack.c.b16 %v1397, %v1396
    %v1419 = vpack.c.b16 %v1399, %v1398
    %v1420 = vpack.c.b16 %v1401, %v1400
    %v1421 = vpack.c.b16 %v1403, %v1402
    %v1422 = vpack.c.b16 %v1405, %v1404
    %v1423 = vpack.c.b16 %v1407, %v1406
    %1440 = vmatprep.subr.bf16.mxu0 0
    %1441 = vmatpush1.bf16.msra.mxu0 %v1408
    %1442 = vmatprep.subr.bf16.mxu0 0
    %1443 = vmatpush1.bf16.msra.mxu0 %v1409
    %1444 = vmatprep.subr.bf16.mxu0 0
    %1445 = vmatpush1.bf16.msra.mxu0 %v1410
    %1446 = vmatprep.subr.bf16.mxu0 0
    %1447 = vmatpush1.bf16.msra.mxu0 %v1411
    %1448 = vmatprep.subr.bf16.mxu0 0
    %1449 = vmatpush1.bf16.msra.mxu0 %v1412
    %1450 = vmatprep.subr.bf16.mxu0 0
    %1451 = vmatpush1.bf16.msra.mxu0 %v1413
    %1452 = vmatprep.subr.bf16.mxu0 0
    %1453 = vmatpush1.bf16.msra.mxu0 %v1414
    %1454 = vmatprep.subr.bf16.mxu0 0
    %1455 = vmatpush1.bf16.msra.mxu0 %v1415
    %1456 = vmatprep.subr.bf16.mxu0 0
    %1457 = vmatpush1.bf16.msra.mxu0 %v1416
    %1458 = vmatprep.subr.bf16.mxu0 0
    %1459 = vmatpush1.bf16.msra.mxu0 %v1417
    %1460 = vmatprep.subr.bf16.mxu0 0
    %1461 = vmatpush1.bf16.msra.mxu0 %v1418
    %1462 = vmatprep.subr.bf16.mxu0 0
    %1463 = vmatpush1.bf16.msra.mxu0 %v1419
    %1464 = vmatprep.subr.bf16.mxu0 0
    %1465 = vmatpush1.bf16.msra.mxu0 %v1420
    %1466 = vmatprep.subr.bf16.mxu0 0
    %1467 = vmatpush1.bf16.msra.mxu0 %v1421
    %1468 = vmatprep.subr.bf16.mxu0 0
    %1469 = vmatpush1.bf16.msra.mxu0 %v1422
    %1470 = vmatprep.subr.bf16.mxu0 0
    %1471 = vmatpush1.bf16.msra.mxu0 %v1423
    %1472 = vmatprep.mubr.bf16.mxu0 %v1304
    %1473 = vmatmul.mubr.bf16.gmra.mrb[0].mxu0 %v1303
    %v1474 = vpop.f32.mrb[0].mxu0
    %v1475 = vadd.f32 %v1342, %v1474
    %v1476 = vpop.f32.mrb[0].mxu0
    %v1477 = vpop.f32.mrb[0].mxu0
    %v1478 = vadd.f32 %v1342, %v1477
    %v1479 = vpop.f32.mrb[0].mxu0
    %1480 = vdwg.mxu0
    %v1481 = vpack.c.bf16 %v1478, %v1475
    %v1483 = vunpack.c.l.b16 %v1481
    %v1484 = vunpack.c.h.b16 %v1481
    %v1485 = vpack.c.b16 %v1483, %v1483
    %v1486 = vpack.c.b16 %v1484, %v1484
    %1489 = vst [vmem:[#allocation23] sm:$0xf] %v1485
    %1490 = vst [vmem:[#allocation23 + $0x4] sm:$0xf] %v1486
    // Predicated region
    $region106: #{tpu_custom_call.1} parent=1 // pred_check
      _
    $region107: #{tpu_custom_call.1} parent=1 // pred_check_branch
      %1492 = sbr.rel (0) target = $region109
    $region108: #{tpu_custom_call.1} parent=1 // pred_region
      %s1494 = ssub.s32 128, 128
      %1495 = vsyncadd [#allocation4], %s1494
      %s1496 = sshll.u32 [#allocation23], 4
      %s1497 = int_to_ptr.vmem [resolvable:$true] %s1496
      %1502 = dma.vmem_to_hbm [thread:$0]  %s1497, 128, %s13, [#allocation4], 64, 64, 4
    $region109: #{tpu_custom_call.1} parent=1 // pred_fallthru
      _
    // Predicated region
    $region110: #{tpu_custom_call.1} parent=1 // pred_check
      _
    $region111: #{tpu_custom_call.1} parent=1 // pred_check_branch
      %1504 = sbr.rel (0) target = $region113
    $region112: #{tpu_custom_call.1} parent=1 // pred_region
      %1505 = dma.done [#allocation4], 128
    $region113: #{tpu_custom_call.1} parent=1 // pred_fallthru
      _
    %1506 = vsyncpa [#allocation3], 1
    %1507 = vsyncpa [#allocation6], 1
    %1508 = vsyncpa [#allocation9], 1
    %1509 = vsyncpa [#allocation12], 1
    %1510 = vsyncpa [#allocation15], 1
    %1511 = vsyncpa [#allocation18], 1
    %1512 = vsyncpa [#allocation21], 1
    %1513 = vsyncpa [#allocation4], 1

</llo_original>
